<compile_context>
chip_gen: v7x
topology: tpu7x:2x2x1
jax: 0.10.0
libtpu: 0.0.40
codegen_flags: <defaults>
</compile_context>

<pallas_src>
import numpy as np
import jax
import jax.numpy as jnp
from jax.experimental import pallas as pl
from jax.experimental.pallas import tpu as pltpu

HIGHEST = jax.lax.Precision.HIGHEST


# ----------------------------------------------------------------------------
# Tiling / VMEM sizing helpers
# ----------------------------------------------------------------------------
def _round_up(x, m):
    return ((x + m - 1) // m) * m


def _vmem_capacity_bytes():
    """Per-TensorCore VMEM; conservative (v7x-sized) fallback if unknown."""
    try:
        return int(pltpu.get_tpu_info().vmem_capacity_bytes)
    except Exception:
        return 64 * 1024 * 1024


def _largest_divisor_mult8(n, cap):
    """Largest multiple-of-8 divisor of n that is <= cap.

    Falls back to the full dimension (always a legal Mosaic block extent)."""
    best = None
    for d in range(8, int(min(cap, n)) + 1, 8):
        if n % d == 0:
            best = d
    return best if best is not None else n


def _pick_tiles(N, D, DH, e_out_itemsize, tile_budget_bytes):
    # j-tile: target 128 (lane-dense score tile, MXU-shaped att@V K dim).
    tj = _largest_divisor_mult8(N, 128)
    # i-tile: fill the streamed-tile budget with double-buffered e-in/e-out.
    d_pad = _round_up(D, 128)
    dh_pad = _round_up(DH, 128)
    tj_pad = _round_up(tj, 8)
    per_ti = tj_pad * (d_pad * 4 + dh_pad * e_out_itemsize) * 2  # 2 pipeline bufs
    ti_cap = max(8, tile_budget_bytes // per_ti)
    ti = _largest_divisor_mult8(N, ti_cap)
    return ti, tj


# ----------------------------------------------------------------------------
# Kernel
# ----------------------------------------------------------------------------
def make_attention_kernel(N, D, DH, TI, TJ):
    def kernel(ni_ref, nj_ref, e_ref, we_ref, be_ref, xo_ref, eo_ref, s_ref):
        j = pl.program_id(1)
        i = pl.program_id(2)
        n_i = pl.num_programs(2)

        # Zero the VMEM-resident x_out block once per batch.
        @pl.when(jnp.logical_and(j == 0, i == 0))
        def _init():
            xo_ref[...] = jnp.zeros(xo_ref.shape, xo_ref.dtype)

        q = ni_ref[0, 0]       # (TI, DH), pre-scaled by 1/sqrt(DH)
        ni = ni_ref[0, 1]      # (TI, DH)
        k = nj_ref[0, 0]       # (TJ, DH)
        v = nj_ref[0, 1]       # (TJ, DH)
        nj = nj_ref[0, 2]      # (TJ, DH)

        # ---- edge projection for this (i, j) tile ----
        e_t = e_ref[0]                                          # (TI, TJ, D)
        E = (jnp.dot(e_t.reshape(TI * TJ, D), we_ref[...],
                     preferred_element_type=jnp.float32,
                     precision=HIGHEST)
             + be_ref[...]).reshape(TI, TJ, DH)

        # e_new = Ni.unsqueeze(2) + Nj.unsqueeze(1) + E
        e_new = ni[:, None, :] + nj[None, :, :] + E             # (TI, TJ, DH)
        eo_ref[0] = e_new.astype(eo_ref.dtype)

        # Score tile: Att[i,j] = sum_h Q[i,h] * e_new[i,j,h] * K[j,h]
        # (Q is pre-scaled by 1/sqrt(DH) in the wrapper.)
        # TODO(synk): on v7x the DH-contraction could be pushed to the MXU
        # (ones-column dot) to free VPU/XLU slots; kept as a vector reduce.
        s = jnp.sum(q[:, None, :] * e_new * k[None, :, :], axis=-1)  # (TI, TJ)
        row = pl.multiple_of(i * TI, TI)
        s_ref[pl.ds(row, TI), :] = s

        # At the last i step the full (N, TJ) score column block is buffered:
        # exact softmax over i, then accumulate Att @ V over j tiles.
        @pl.when(i == n_i - 1)
        def _softmax_and_accumulate():
            scores = s_ref[...]                                  # (N, TJ)
            m = jnp.max(scores, axis=0, keepdims=True)
            p = jnp.exp(scores - m)
            att = p / jnp.sum(p, axis=0, keepdims=True)          # exact divide
            # dropout(p=0.0) is identity.
            xo_ref[0] += jnp.dot(att, v,
                                 preferred_element_type=jnp.float32,
                                 precision=HIGHEST).astype(xo_ref.dtype)

    return kernel


# ----------------------------------------------------------------------------
# Wrapper
# ----------------------------------------------------------------------------
def attention_vanilla_pallas(x, e, params, *, ti=None, tj=None,
                             e_out_dtype=None, tile_budget_bytes=None):
    B, N, D = x.shape
    assert e.shape == (B, N, N, D), f"bad e shape {e.shape}"
    DH = params["wq"].shape[1]
    e_out_dtype = e.dtype if e_out_dtype is None else e_out_dtype
    e_out_itemsize = jnp.dtype(e_out_dtype).itemsize

    # Generation-conditional VMEM budgets (v7x: 64 MiB/TC; v5e/v6e: 128 MiB).
    vmem_cap = _vmem_capacity_bytes()
    if tile_budget_bytes is None:
        tile_budget_bytes = max(8 << 20, int(vmem_cap * 0.40))
    vmem_limit = int(min(vmem_cap * 0.82, vmem_cap - (12 << 20)))
    vmem_limit = max(vmem_limit, 32 << 20)

    auto_ti, auto_tj = _pick_tiles(N, D, DH, e_out_itemsize, tile_budget_bytes)
    ti = auto_ti if ti is None else ti
    tj = auto_tj if tj is None else tj
    assert N % ti == 0 and N % tj == 0, f"tiles ({ti},{tj}) must divide N={N}"

    # ---- node projections (tiny vs the e stream): plain XLA, fused ---------
    w_node = jnp.concatenate([params["wq"], params["wk"], params["wv"],
                              params["wni"], params["wnj"]], axis=1)
    b_node = jnp.concatenate([params["bq"], params["bk"], params["bv"],
                              params["bni"], params["bnj"]], axis=1)
    proj = (jnp.einsum("bnd,dh->bnh", x.astype(jnp.float32), w_node,
                       precision=HIGHEST) + b_node[0])           # (B, N, 5*DH)
    proj = proj.reshape(B, N, 5, DH)
    inv_sqrt_d = jnp.float32(1.0 / np.sqrt(DH))
    node_i = jnp.stack([proj[:, :, 0] * inv_sqrt_d,   # Q / sqrt(d_head)
                        proj[:, :, 3]], axis=1)       # Ni      -> (B, 2, N, DH)
    node_j = jnp.stack([proj[:, :, 1],                # K
                        proj[:, :, 2],                # V
                        proj[:, :, 4]], axis=1)       # Nj      -> (B, 3, N, DH)

    kernel = make_attention_kernel(N, D, DH, ti, tj)
    grid = (B, N // tj, N // ti)          # i innermost

    in_specs = [
        pl.BlockSpec((1, 2, ti, DH), lambda b, j, i: (b, 0, i, 0)),   # Q, Ni
        pl.BlockSpec((1, 3, tj, DH), lambda b, j, i: (b, 0, j, 0)),   # K, V, Nj
        pl.BlockSpec((1, ti, tj, D), lambda b, j, i: (b, i, j, 0)),   # e tile
        pl.BlockSpec((D, DH), lambda b, j, i: (0, 0)),                # we
        pl.BlockSpec((1, DH), lambda b, j, i: (0, 0)),                # be
    ]
    out_specs = [
        pl.BlockSpec((1, N, DH), lambda b, j, i: (b, 0, 0)),          # x_out
        pl.BlockSpec((1, ti, tj, DH), lambda b, j, i: (b, i, j, 0)),  # e_out
    ]
    out_shape = [
        jax.ShapeDtypeStruct((B, N, DH), jnp.float32),
        jax.ShapeDtypeStruct((B, N, N, DH), e_out_dtype),
    ]
    scratch_shapes = [
        pltpu.VMEM((N, tj), jnp.float32),   # per-j-tile score buffer
    ]

    fn = pl.pallas_call(
        kernel,
        grid=grid,
        in_specs=in_specs,
        out_specs=out_specs,
        out_shape=out_shape,
        scratch_shapes=scratch_shapes,
        compiler_params=pltpu.CompilerParams(
            # x_out is accumulated across both the j and i axes -> reductions.
            dimension_semantics=("parallel", "arbitrary", "arbitrary"),
            vmem_limit_bytes=vmem_limit,
        ),
    )
    x_out, e_out = fn(node_i, node_j, e, params["we"], params["be"])
    return x_out, e_out


# ----------------------------------------------------------------------------
# Reference + test harness
# ----------------------------------------------------------------------------
def init_params(key, d, d_head):
    """nn.Linear-style init U(-1/sqrt(d), 1/sqrt(d)); weights stored (d, d_head)."""
    bound = 1.0 / np.sqrt(d)
    params = {}
    for name in ("q", "k", "v", "e", "ni", "nj"):
        key, kw, kb = jax.random.split(key, 3)
        params["w" + name] = jax.random.uniform(
            kw, (d, d_head), jnp.float32, minval=-bound, maxval=bound)
        params["b" + name] = jax.random.uniform(
            kb, (1, d_head), jnp.float32, minval=-bound, maxval=bound)
    return params


def reference(x, e, params):
    """Pure-JAX reference matching the PyTorch forward (f32, highest precision)."""
    DH = params["wq"].shape[1]

    def lin(v, w, b):
        return jnp.einsum("...d,dh->...h", v, w, precision=HIGHEST) + b[0]

    Q = lin(x, params["wq"], params["bq"])
    K = lin(x, params["wk"], params["bk"])
    V = lin(x, params["wv"], params["bv"])
    Ni = lin(x, params["wni"], params["bni"])
    Nj = lin(x, params["wnj"], params["bnj"])
    E = lin(e, params["we"], params["be"])
    e_new = Ni[:, :, None, :] + Nj[:, None, :, :] + E
    att = jnp.sum(Q[:, :, None, :] * e_new * K[:, None, :, :],
                  axis=-1) / jnp.sqrt(jnp.float32(DH))
    att = jax.nn.softmax(att, axis=1)
    x_out = jnp.einsum("bij,bjd->bid", att, V, precision=HIGHEST)
    return x_out, e_new


def _check(key, B, N, D, DH, ti=None, tj=None):
    kx, ke, kp = jax.random.split(key, 3)
    x = jax.random.normal(kx, (B, N, D), jnp.float32)
    e = jax.random.normal(ke, (B, N, N, D), jnp.float32)
    params = init_params(kp, D, DH)

    x_out, e_out = attention_vanilla_pallas(x, e, params, ti=ti, tj=tj)
    jax.block_until_ready((x_out, e_out))

    x_ref, e_ref = reference(x, e, params)
    np.testing.assert_allclose(np.asarray(e_out), np.asarray(e_ref),
                               rtol=1e-4, atol=1e-5)
    np.testing.assert_allclose(np.asarray(x_out), np.asarray(x_ref),
                               rtol=1e-3, atol=1e-4)


if __name__ == "__main__":
    key = jax.random.PRNGKey(0)
    k1, k2 = jax.random.split(key)

    # Case 1: single (i, j) tile per batch (auto tiling).
    _check(k1, B=2, N=8, D=32, DH=16)
    # Case 2: forced i/j tiling -> grid (B, 2, 2): exercises the buffered
    # per-j-tile scores, the softmax at the last i step, and the x_out
    # accumulation across j tiles in the VMEM-resident output block.
    _check(k2, B=2, N=16, D=32, DH=16, ti=8, tj=8)

    print("KERNEL_OK")
</pallas_src>

<mosaic_0001>
module attributes {stable_mosaic.version = 11 : i64} {
  func.func @kernel(%arg0: i32, %arg1: i32, %arg2: i32, %arg3: memref<1x2x8x16xf32, #tpu.memory_space<vmem>>, %arg4: memref<1x3x8x16xf32, #tpu.memory_space<vmem>>, %arg5: memref<1x8x8x32xf32, #tpu.memory_space<vmem>>, %arg6: memref<32x16xf32, #tpu.memory_space<vmem>>, %arg7: memref<1x16xf32, #tpu.memory_space<vmem>>, %arg8: memref<1x8x16xf32, #tpu.memory_space<vmem>>, %arg9: memref<1x8x8x16xf32, #tpu.memory_space<vmem>>, %arg10: memref<8x8xf32, #tpu.memory_space<vmem>>) attributes {dimension_semantics = [#tpu.dimension_semantics<parallel>, #tpu.dimension_semantics<arbitrary>, #tpu.dimension_semantics<arbitrary>], iteration_bounds = array<i64: 2, 1, 1>, scalar_prefetch = 0 : i64, scratch_operands = 1 : i64, tpu.core_type = #tpu.core_type<tc>, window_params = [{transform_indices = @transform_0, window_bounds = array<i64: 1, 2, 8, 16>}, {transform_indices = @transform_1, window_bounds = array<i64: 1, 3, 8, 16>}, {transform_indices = @transform_2, window_bounds = array<i64: 1, 8, 8, 32>}, {pipeline_mode = #tpu.pipeline_mode<synchronous>, transform_indices = @transform_3, window_bounds = array<i64: 32, 16>}, {pipeline_mode = #tpu.pipeline_mode<synchronous>, transform_indices = @transform_4, window_bounds = array<i64: 1, 16>}, {transform_indices = @transform_5, window_bounds = array<i64: 1, 8, 16>}, {transform_indices = @transform_6, window_bounds = array<i64: 1, 8, 8, 16>}]} {
    %c0_i32 = arith.constant 0 : i32
    %0 = arith.cmpi eq, %arg1, %c0_i32 : i32
    %c0_i32_0 = arith.constant 0 : i32
    %1 = arith.cmpi eq, %arg2, %c0_i32_0 : i32
    %2 = arith.andi %0, %1 : i1
    %3 = arith.extui %2 : i1 to i32
    %c0_i32_1 = arith.constant 0 : i32
    %4 = arith.cmpi ne, %3, %c0_i32_1 : i32
    scf.if %4 {
      %cst_35 = arith.constant 0.000000e+00 : f32
      %47 = vector.broadcast %cst_35 : f32 to vector<1x8x16xf32>
      %c0_36 = arith.constant 0 : index
      %c0_37 = arith.constant 0 : index
      %c0_38 = arith.constant 0 : index
      %48 = vector.load %arg8[%c0_36, %c0_37, %c0_38] : memref<1x8x16xf32, #tpu.memory_space<vmem>>, vector<1x8x16xf32>
      tpu.vector_store %arg8[%c0_36, %c0_37, %c0_38], %47 {strides = array<i32>} : memref<1x8x16xf32, #tpu.memory_space<vmem>>, vector<1x8x16xf32>,
    } else {
    }
    %c0 = arith.constant 0 : index
    %c0_2 = arith.constant 0 : index
    %c0_3 = arith.constant 0 : index
    %c0_4 = arith.constant 0 : index
    %5 = vector.load %arg3[%c0, %c0_2, %c0_3, %c0_4] : memref<1x2x8x16xf32, #tpu.memory_space<vmem>>, vector<1x1x8x16xf32>
    %6 = vector.shape_cast %5 : vector<1x1x8x16xf32> to vector<8x16xf32>
    %c0_5 = arith.constant 0 : index
    %c1 = arith.constant 1 : index
    %c0_6 = arith.constant 0 : index
    %c0_7 = arith.constant 0 : index
    %7 = vector.load %arg3[%c0_5, %c1, %c0_6, %c0_7] : memref<1x2x8x16xf32, #tpu.memory_space<vmem>>, vector<1x1x8x16xf32>
    %8 = vector.shape_cast %7 : vector<1x1x8x16xf32> to vector<8x16xf32>
    %c0_8 = arith.constant 0 : index
    %c0_9 = arith.constant 0 : index
    %c0_10 = arith.constant 0 : index
    %c0_11 = arith.constant 0 : index
    %9 = vector.load %arg4[%c0_8, %c0_9, %c0_10, %c0_11] : memref<1x3x8x16xf32, #tpu.memory_space<vmem>>, vector<1x1x8x16xf32>
    %10 = vector.shape_cast %9 : vector<1x1x8x16xf32> to vector<8x16xf32>
    %c0_12 = arith.constant 0 : index
    %c1_13 = arith.constant 1 : index
    %c0_14 = arith.constant 0 : index
    %c0_15 = arith.constant 0 : index
    %11 = vector.load %arg4[%c0_12, %c1_13, %c0_14, %c0_15] : memref<1x3x8x16xf32, #tpu.memory_space<vmem>>, vector<1x1x8x16xf32>
    %12 = vector.shape_cast %11 : vector<1x1x8x16xf32> to vector<8x16xf32>
    %c0_16 = arith.constant 0 : index
    %c2 = arith.constant 2 : index
    %c0_17 = arith.constant 0 : index
    %c0_18 = arith.constant 0 : index
    %13 = vector.load %arg4[%c0_16, %c2, %c0_17, %c0_18] : memref<1x3x8x16xf32, #tpu.memory_space<vmem>>, vector<1x1x8x16xf32>
    %14 = vector.shape_cast %13 : vector<1x1x8x16xf32> to vector<8x16xf32>
    %c0_19 = arith.constant 0 : index
    %c0_20 = arith.constant 0 : index
    %c0_21 = arith.constant 0 : index
    %c0_22 = arith.constant 0 : index
    %15 = vector.load %arg5[%c0_19, %c0_20, %c0_21, %c0_22] : memref<1x8x8x32xf32, #tpu.memory_space<vmem>>, vector<1x8x8x32xf32>
    %16 = vector.shape_cast %15 : vector<1x8x8x32xf32> to vector<8x8x32xf32>
    %17 = vector.shape_cast %16 : vector<8x8x32xf32> to vector<64x32xf32>
    %c0_23 = arith.constant 0 : index
    %c0_24 = arith.constant 0 : index
    %18 = vector.load %arg6[%c0_23, %c0_24] : memref<32x16xf32, #tpu.memory_space<vmem>>, vector<32x16xf32>
    %cst = arith.constant dense<0.000000e+00> : vector<64x16xf32>
    %19 = tpu.matmul %17, %18, %cst {dimension_numbers = #tpu.dot_dimension_numbers<[1], [0], [0], [1], [0, 0, 1, 1], [], []>, precision = #tpu.contract_precision<fp32>} : vector<64x32xf32>, vector<32x16xf32>, vector<64x16xf32> -> vector<64x16xf32>
    %c0_25 = arith.constant 0 : index
    %c0_26 = arith.constant 0 : index
    %20 = vector.load %arg7[%c0_25, %c0_26] : memref<1x16xf32, #tpu.memory_space<vmem>>, vector<1x16xf32>
    %21 = vector.broadcast %20 : vector<1x16xf32> to vector<64x16xf32>
    %22 = arith.addf %19, %21 : vector<64x16xf32>
    %23 = vector.shape_cast %22 : vector<64x16xf32> to vector<8x8x16xf32>
    %24 = vector.shape_cast %8 : vector<8x16xf32> to vector<8x1x16xf32>
    %25 = vector.shape_cast %14 : vector<8x16xf32> to vector<1x8x16xf32>
    %26 = vector.broadcast %24 : vector<8x1x16xf32> to vector<8x8x16xf32>
    %27 = vector.broadcast %25 : vector<1x8x16xf32> to vector<8x8x16xf32>
    %28 = arith.addf %26, %27 : vector<8x8x16xf32>
    %29 = arith.addf %28, %23 : vector<8x8x16xf32>
    %c0_27 = arith.constant 0 : index
    %c0_28 = arith.constant 0 : index
    %c0_29 = arith.constant 0 : index
    %c0_30 = arith.constant 0 : index
    %30 = vector.load %arg9[%c0_27, %c0_28, %c0_29, %c0_30] : memref<1x8x8x16xf32, #tpu.memory_space<vmem>>, vector<1x8x8x16xf32>
    %31 = vector.shape_cast %30 : vector<1x8x8x16xf32> to vector<8x8x16xf32>
    %32 = vector.shape_cast %29 : vector<8x8x16xf32> to vector<1x8x8x16xf32>
    tpu.vector_store %arg9[%c0_27, %c0_28, %c0_29, %c0_30], %32 {strides = array<i32>} : memref<1x8x8x16xf32, #tpu.memory_space<vmem>>, vector<1x8x8x16xf32>,
    %33 = vector.shape_cast %6 : vector<8x16xf32> to vector<8x1x16xf32>
    %34 = vector.broadcast %33 : vector<8x1x16xf32> to vector<8x8x16xf32>
    %35 = arith.mulf %34, %29 : vector<8x8x16xf32>
    %36 = vector.shape_cast %10 : vector<8x16xf32> to vector<1x8x16xf32>
    %37 = vector.broadcast %36 : vector<1x8x16xf32> to vector<8x8x16xf32>
    %38 = arith.mulf %35, %37 : vector<8x8x16xf32>
    %cst_31 = arith.constant dense<0.000000e+00> : vector<8x8xf32>
    %39 = vector.multi_reduction <add>, %38, %cst_31 [2] : vector<8x8x16xf32> to vector<8x8xf32>
    %c8_i32 = arith.constant 8 : i32
    %40 = arith.muli %arg2, %c8_i32 : i32
    %41 = tpu.assume_multiple %40, 8 : i32
    %42 = arith.index_cast %41 : i32 to index
    %c0_32 = arith.constant 0 : index
    %43 = vector.load %arg10[%42, %c0_32] : memref<8x8xf32, #tpu.memory_space<vmem>>, vector<8x8xf32>
    tpu.vector_store %arg10[%42, %c0_32], %39 {strides = array<i32>} : memref<8x8xf32, #tpu.memory_space<vmem>>, vector<8x8xf32>,
    %c0_i32_33 = arith.constant 0 : i32
    %44 = arith.cmpi eq, %arg2, %c0_i32_33 : i32
    %45 = arith.extui %44 : i1 to i32
    %c0_i32_34 = arith.constant 0 : i32
    %46 = arith.cmpi ne, %45, %c0_i32_34 : i32
    scf.if %46 {
      %c0_35 = arith.constant 0 : index
      %c0_36 = arith.constant 0 : index
      %47 = vector.load %arg10[%c0_35, %c0_36] : memref<8x8xf32, #tpu.memory_space<vmem>>, vector<8x8xf32>
      %cst_37 = arith.constant dense<0xFF800000> : vector<8xf32>
      %48 = vector.multi_reduction <maximumf>, %47, %cst_37 [0] : vector<8x8xf32> to vector<8xf32>
      %49 = vector.shape_cast %48 : vector<8xf32> to vector<1x8xf32>
      %50 = vector.broadcast %49 : vector<1x8xf32> to vector<8x8xf32>
      %51 = arith.subf %47, %50 : vector<8x8xf32>
      %52 = math.exp %51 : vector<8x8xf32>
      %cst_38 = arith.constant dense<0.000000e+00> : vector<8xf32>
      %53 = vector.multi_reduction <add>, %52, %cst_38 [0] : vector<8x8xf32> to vector<8xf32>
      %54 = vector.shape_cast %53 : vector<8xf32> to vector<1x8xf32>
      %55 = vector.broadcast %54 : vector<1x8xf32> to vector<8x8xf32>
      %56 = arith.divf %52, %55 : vector<8x8xf32>
      %c0_39 = arith.constant 0 : index
      %c0_40 = arith.constant 0 : index
      %c0_41 = arith.constant 0 : index
      %57 = vector.load %arg8[%c0_39, %c0_40, %c0_41] : memref<1x8x16xf32, #tpu.memory_space<vmem>>, vector<1x8x16xf32>
      %58 = vector.shape_cast %57 : vector<1x8x16xf32> to vector<8x16xf32>
      %cst_42 = arith.constant dense<0.000000e+00> : vector<8x16xf32>
      %59 = tpu.matmul %56, %12, %cst_42 {dimension_numbers = #tpu.dot_dimension_numbers<[1], [0], [0], [1], [0, 0, 1, 1], [], []>, precision = #tpu.contract_precision<fp32>} : vector<8x8xf32>, vector<8x16xf32>, vector<8x16xf32> -> vector<8x16xf32>
      %60 = arith.addf %58, %59 : vector<8x16xf32>
      %c0_43 = arith.constant 0 : index
      %c0_44 = arith.constant 0 : index
      %c0_45 = arith.constant 0 : index
      %61 = vector.load %arg8[%c0_43, %c0_44, %c0_45] : memref<1x8x16xf32, #tpu.memory_space<vmem>>, vector<1x8x16xf32>
      %62 = vector.shape_cast %61 : vector<1x8x16xf32> to vector<8x16xf32>
      %63 = vector.shape_cast %60 : vector<8x16xf32> to vector<1x8x16xf32>
      tpu.vector_store %arg8[%c0_43, %c0_44, %c0_45], %63 {strides = array<i32>} : memref<1x8x16xf32, #tpu.memory_space<vmem>>, vector<1x8x16xf32>,
    } else {
    }
    return
  }
  func.func @transform_0(%arg0: i32, %arg1: i32, %arg2: i32) -> (i32, i32, i32, i32) {
    %c0_i32 = arith.constant 0 : i32
    %c0_i32_0 = arith.constant 0 : i32
    %c0_i32_1 = arith.constant 0 : i32
    return %arg0, %c0_i32, %arg2, %c0_i32_0 : i32, i32, i32, i32
  }
  func.func @transform_1(%arg0: i32, %arg1: i32, %arg2: i32) -> (i32, i32, i32, i32) {
    %c0_i32 = arith.constant 0 : i32
    %c0_i32_0 = arith.constant 0 : i32
    %c0_i32_1 = arith.constant 0 : i32
    return %arg0, %c0_i32, %arg1, %c0_i32_0 : i32, i32, i32, i32
  }
  func.func @transform_2(%arg0: i32, %arg1: i32, %arg2: i32) -> (i32, i32, i32, i32) {
    %c0_i32 = arith.constant 0 : i32
    %c0_i32_0 = arith.constant 0 : i32
    return %arg0, %arg2, %arg1, %c0_i32 : i32, i32, i32, i32
  }
  func.func @transform_3(%arg0: i32, %arg1: i32, %arg2: i32) -> (i32, i32) {
    %c0_i32 = arith.constant 0 : i32
    %c0_i32_0 = arith.constant 0 : i32
    %c0_i32_1 = arith.constant 0 : i32
    return %c0_i32, %c0_i32_0 : i32, i32
  }
  func.func @transform_4(%arg0: i32, %arg1: i32, %arg2: i32) -> (i32, i32) {
    %c0_i32 = arith.constant 0 : i32
    %c0_i32_0 = arith.constant 0 : i32
    %c0_i32_1 = arith.constant 0 : i32
    return %c0_i32, %c0_i32_0 : i32, i32
  }
  func.func @transform_5(%arg0: i32, %arg1: i32, %arg2: i32) -> (i32, i32, i32) {
    %c0_i32 = arith.constant 0 : i32
    %c0_i32_0 = arith.constant 0 : i32
    %c0_i32_1 = arith.constant 0 : i32
    return %arg0, %c0_i32, %c0_i32_0 : i32, i32, i32
  }
  func.func @transform_6(%arg0: i32, %arg1: i32, %arg2: i32) -> (i32, i32, i32, i32) {
    %c0_i32 = arith.constant 0 : i32
    %c0_i32_0 = arith.constant 0 : i32
    return %arg0, %arg2, %arg1, %c0_i32 : i32, i32, i32, i32
  }
}

</mosaic_0001>

<llo_original>
// kernel: tpu_custom_call.1
$region0: #{tpu_custom_call.1}
  #allocation0 [shape = 'u32[]', space=smem, size = 0x4, offset = 0x4, fixed_abs, tag = 'smem constant byte address 0x4 - core index']
  #allocation1 [shape = 'u32[144,128]{1,0:T(1,128)}', space=vmem, size = 0x12000, scoped, tag = 'internal scratch']
  #allocation2 [shape = 'f32[8,8]{1,0:T(8,128)}', space=vmem, size = 0x1000, scoped, tag = 'scratch operand']
  %s0 = inlined_call_operand.hbm [shape: f32[2,2,8,16], index: 0, kind: input, shape index: {}]
  %s1 = inlined_call_operand.vmem [shape: f32[2,3,8,16], index: 1, kind: input, shape index: {}]
  %s2 = inlined_call_operand.hbm [shape: f32[2,8,8,32], index: 2, kind: input, shape index: {}]
  %s3 = inlined_call_operand.vmem [shape: f32[32,16], index: 3, kind: input, shape index: {}]
  %s4 = inlined_call_operand.vmem [shape: f32[1,16], index: 4, kind: input, shape index: {}]
  %s5 = inlined_call_operand.hbm [shape: f32[2,8,16], index: 5, kind: output, shape index: {0}]
  %s6 = inlined_call_operand.hbm [shape: f32[2,8,8,16], index: 6, kind: output, shape index: {1}]
  %7 = xla_tuple %s5, %s6
  %s8 = sld [smem:[#allocation0]]
  $region77: #{tpu_custom_call.1} parent=0
    _
  %s10 = ssub.s32 1, %s8
  %s11 = scalar_select 0, %s10, %s8
  $region1: #{tpu_custom_call.1} parent=0
    #allocation3 [shape = 'u8[16384]{0}', space=vmem, size = 0x4000, scoped, tag = 'input window, operand 0']
    #allocation4 [shape = 's32[2]{0}', space=sflag, size = 0x8, scoped, tag = 'scoped memory for tpu_custom_call.1']
    #allocation5 [shape = 's32[2]{0}', space=sflag, size = 0x8, scoped, tag = 'scoped memory for tpu_custom_call.1']
    #allocation6 [shape = 'u8[65536]{0}', space=vmem, size = 0x10000, scoped, tag = 'input window, operand 2']
    #allocation7 [shape = 's32[2]{0}', space=sflag, size = 0x8, scoped, tag = 'scoped memory for tpu_custom_call.1']
    #allocation8 [shape = 'u8[8192]{0}', space=vmem, size = 0x2000, scoped, tag = 'output window, operand 0']
    #allocation9 [shape = 'u8[65536]{0}', space=vmem, size = 0x10000, scoped, tag = 'output window, operand 1']
    #allocation10 [shape = 's32[2]{0}', space=sflag, size = 0x8, scoped, tag = 'scoped memory for tpu_custom_call.1']
    %12 = vsyncpa [#allocation4], 0
    %s13 = scalar_lea.sflag [#allocation4], 1
    %14 = vsyncpa %s13, 0
    %15 = vsyncpa [#allocation7], 0
    %s16 = scalar_lea.sflag [#allocation7], 1
    %17 = vsyncpa %s16, 0
    %18 = vsyncpa [#allocation5], 0
    %s19 = scalar_lea.sflag [#allocation5], 1
    %20 = vsyncpa %s19, 0
    %21 = vsyncpa [#allocation10], 0
    %s22 = scalar_lea.sflag [#allocation10], 1
    %23 = vsyncpa %s22, 0
    loop: start=0, step=1, limit=4
    $region2: #{tpu_custom_call.1} parent=1 // loop_pre_header
      _
    $region3: #{tpu_custom_call.1} parent=1 // loop_header
      %s25 = sphi 0, %s29
      %p26 = scmp.ge.s32.totalorder %s25, 4
      %s32 = sphi 0, %s51
      %s33 = sphi 0, %s47
      %s34 = sphi 0, %s43
      %s35 = sphi 0, %s32
      %s36 = sphi 0, %s33
      %s37 = sphi 0, %s34
      %s38 = sphi 0, %s35
      %s39 = sphi 0, %s36
      %s40 = sphi 0, %s37
      %s56 = sphi 0, %s58
      %s59 = sphi 0, %s56
      %s60 = sphi 0, %s59
      %s76 = sphi 0, %s60
      %s84 = sphi 0, %s86
      %s87 = sphi 0, %s84
      %s88 = sphi 0, %s87
      %s104 = sphi 0, %s88
      %s114 = sphi 0, %s116
      %s117 = sphi 0, %s114
      %s118 = sphi 0, %s117
      %s134 = sphi 0, %s118
      %s138 = sphi 0, %s138
      %s140 = sphi 0, %s138
      %s141 = sphi 0, %s140
      %s155 = sphi 0, %s141
      %s159 = sphi 0, %s159
      %s161 = sphi 0, %s159
      %s162 = sphi 0, %s161
      %s176 = sphi 0, %s162
      %s182 = sphi 0, %s184
      %s185 = sphi 0, %s182
      %s186 = sphi 0, %s185
      %s202 = sphi 0, %s186
      %s212 = sphi 0, %s214
      %s215 = sphi 0, %s212
      %s216 = sphi 0, %s215
      %s232 = sphi 0, %s216
    $region4: #{tpu_custom_call.1} parent=1 // loop_header_branch
      %28 = sbr.rel (%p26) target = $region8
    $region5: #{tpu_custom_call.1} parent=1 // loop_body
      %s30 = ssub.s32 %s25, 1
      %s31 = ssub.s32 %s25, 2
      %s41 = sadd.s32 1, %s34
      %p42 = scmp.ge.s32.totalorder %s41, 1
      %s43 = scalar_select %p42, 0, %s41
      %s44 = sadd.s32 1, %s33
      %s45 = scalar_select %p42, %s44, %s33
      %p46 = scmp.ge.s32.totalorder %s45, 1
      %s47 = scalar_select %p46, 0, %s45
      %s48 = sadd.s32 1, %s32
      %s49 = scalar_select %p46, %s48, %s32
      %p50 = scmp.ge.s32.totalorder %s49, 2
      %s51 = scalar_select %p50, 0, %s49
      %s52 = ssub.s32 %s32, %s51
      %s53 = ssub.s32 %s34, %s43
      %s54 = sor.u32 %s52, %s53
      %p55 = scmp.eq.s32.totalorder %s54, 0
      %s57 = sadd.s32 %s56, 1
      %s58 = scalar_select %p55, %s56, %s57
      %p61 = pneg %p55
      %p62 = scmp.eq.s32.totalorder %s25, 1
      %p63 = por %p61, %p62
      %p64 = scmp.ne.s32.totalorder %s56, %s59
      %p65 = scmp.eq.s32.totalorder %s25, 0
      %p66 = por %p64, %p65
      %p67 = scmp.ne.s32.totalorder %s56, %s59
      %p68 = scmp.eq.s32.totalorder %s30, 1
      %p69 = por %p67, %p68
      %p70 = scmp.ne.s32.totalorder %s59, %s60
      %p71 = scmp.eq.s32.totalorder %s30, 0
      %p72 = por %p70, %p71
      %p73 = scmp.ne.s32.totalorder %s59, %s60
      %p74 = scmp.eq.s32.totalorder %s31, 1
      %p75 = por %p73, %p74
      %p77 = scmp.ne.s32.totalorder %s60, %s76
      %p78 = scmp.eq.s32.totalorder %s31, 0
      %p79 = por %p77, %p78
      %s80 = ssub.s32 %s32, %s51
      %s81 = ssub.s32 %s33, %s47
      %s82 = sor.u32 %s80, %s81
      %p83 = scmp.eq.s32.totalorder %s82, 0
      %s85 = sadd.s32 %s84, 1
      %s86 = scalar_select %p83, %s84, %s85
      %p89 = pneg %p83
      %p90 = scmp.eq.s32.totalorder %s25, 1
      %p91 = por %p89, %p90
      %p92 = scmp.ne.s32.totalorder %s84, %s87
      %p93 = scmp.eq.s32.totalorder %s25, 0
      %p94 = por %p92, %p93
      %p95 = scmp.ne.s32.totalorder %s84, %s87
      %p96 = scmp.eq.s32.totalorder %s30, 1
      %p97 = por %p95, %p96
      %p98 = scmp.ne.s32.totalorder %s87, %s88
      %p99 = scmp.eq.s32.totalorder %s30, 0
      %p100 = por %p98, %p99
      %p101 = scmp.ne.s32.totalorder %s87, %s88
      %p102 = scmp.eq.s32.totalorder %s31, 1
      %p103 = por %p101, %p102
      %p105 = scmp.ne.s32.totalorder %s88, %s104
      %p106 = scmp.eq.s32.totalorder %s31, 0
      %p107 = por %p105, %p106
      %s108 = ssub.s32 %s32, %s51
      %s109 = ssub.s32 %s34, %s43
      %s110 = sor.u32 %s108, %s109
      %s111 = ssub.s32 %s33, %s47
      %s112 = sor.u32 %s110, %s111
      %p113 = scmp.eq.s32.totalorder %s112, 0
      %s115 = sadd.s32 %s114, 1
      %s116 = scalar_select %p113, %s114, %s115
      %p119 = pneg %p113
      %p120 = scmp.eq.s32.totalorder %s25, 1
      %p121 = por %p119, %p120
      %p122 = scmp.ne.s32.totalorder %s114, %s117
      %p123 = scmp.eq.s32.totalorder %s25, 0
      %p124 = por %p122, %p123
      %p125 = scmp.ne.s32.totalorder %s114, %s117
      %p126 = scmp.eq.s32.totalorder %s30, 1
      %p127 = por %p125, %p126
      %p128 = scmp.ne.s32.totalorder %s117, %s118
      %p129 = scmp.eq.s32.totalorder %s30, 0
      %p130 = por %p128, %p129
      %p131 = scmp.ne.s32.totalorder %s117, %s118
      %p132 = scmp.eq.s32.totalorder %s31, 1
      %p133 = por %p131, %p132
      %p135 = scmp.ne.s32.totalorder %s118, %s134
      %p136 = scmp.eq.s32.totalorder %s31, 0
      %p137 = por %p135, %p136
      %s139 = sadd.s32 %s138, 1
      %p142 = scmp.eq.s32.totalorder %s25, 1
      %p143 = scmp.ne.s32.totalorder %s138, %s140
      %p144 = scmp.eq.s32.totalorder %s25, 0
      %p145 = por %p143, %p144
      %p146 = scmp.ne.s32.totalorder %s138, %s140
      %p147 = scmp.eq.s32.totalorder %s30, 1
      %p148 = por %p146, %p147
      %p149 = scmp.ne.s32.totalorder %s140, %s141
      %p150 = scmp.eq.s32.totalorder %s30, 0
      %p151 = por %p149, %p150
      %p152 = scmp.ne.s32.totalorder %s140, %s141
      %p153 = scmp.eq.s32.totalorder %s31, 1
      %p154 = por %p152, %p153
      %p156 = scmp.ne.s32.totalorder %s141, %s155
      %p157 = scmp.eq.s32.totalorder %s31, 0
      %p158 = por %p156, %p157
      %s160 = sadd.s32 %s159, 1
      %p163 = scmp.eq.s32.totalorder %s25, 1
      %p164 = scmp.ne.s32.totalorder %s159, %s161
      %p165 = scmp.eq.s32.totalorder %s25, 0
      %p166 = por %p164, %p165
      %p167 = scmp.ne.s32.totalorder %s159, %s161
      %p168 = scmp.eq.s32.totalorder %s30, 1
      %p169 = por %p167, %p168
      %p170 = scmp.ne.s32.totalorder %s161, %s162
      %p171 = scmp.eq.s32.totalorder %s30, 0
      %p172 = por %p170, %p171
      %p173 = scmp.ne.s32.totalorder %s161, %s162
      %p174 = scmp.eq.s32.totalorder %s31, 1
      %p175 = por %p173, %p174
      %p177 = scmp.ne.s32.totalorder %s162, %s176
      %p178 = scmp.eq.s32.totalorder %s31, 0
      %p179 = por %p177, %p178
      %s180 = ssub.s32 %s32, %s51
      %p181 = scmp.eq.s32.totalorder %s180, 0
      %s183 = sadd.s32 %s182, 1
      %s184 = scalar_select %p181, %s182, %s183
      %p187 = pneg %p181
      %p188 = scmp.eq.s32.totalorder %s25, 1
      %p189 = por %p187, %p188
      %p190 = scmp.ne.s32.totalorder %s182, %s185
      %p191 = scmp.eq.s32.totalorder %s25, 0
      %p192 = por %p190, %p191
      %p193 = scmp.ne.s32.totalorder %s182, %s185
      %p194 = scmp.eq.s32.totalorder %s30, 1
      %p195 = por %p193, %p194
      %p196 = scmp.ne.s32.totalorder %s185, %s186
      %p197 = scmp.eq.s32.totalorder %s30, 0
      %p198 = por %p196, %p197
      %p199 = scmp.ne.s32.totalorder %s185, %s186
      %p200 = scmp.eq.s32.totalorder %s31, 1
      %p201 = por %p199, %p200
      %p203 = scmp.ne.s32.totalorder %s186, %s202
      %p204 = scmp.eq.s32.totalorder %s31, 0
      %p205 = por %p203, %p204
      %s206 = ssub.s32 %s32, %s51
      %s207 = ssub.s32 %s34, %s43
      %s208 = sor.u32 %s206, %s207
      %s209 = ssub.s32 %s33, %s47
      %s210 = sor.u32 %s208, %s209
      %p211 = scmp.eq.s32.totalorder %s210, 0
      %s213 = sadd.s32 %s212, 1
      %s214 = scalar_select %p211, %s212, %s213
      %p217 = pneg %p211
      %p218 = scmp.eq.s32.totalorder %s25, 1
      %p219 = por %p217, %p218
      %p220 = scmp.ne.s32.totalorder %s212, %s215
      %p221 = scmp.eq.s32.totalorder %s25, 0
      %p222 = por %p220, %p221
      %p223 = scmp.ne.s32.totalorder %s212, %s215
      %p224 = scmp.eq.s32.totalorder %s30, 1
      %p225 = por %p223, %p224
      %p226 = scmp.ne.s32.totalorder %s215, %s216
      %p227 = scmp.eq.s32.totalorder %s30, 0
      %p228 = por %p226, %p227
      %p229 = scmp.ne.s32.totalorder %s215, %s216
      %p230 = scmp.eq.s32.totalorder %s31, 1
      %p231 = por %p229, %p230
      %p233 = scmp.ne.s32.totalorder %s216, %s232
      %p234 = scmp.eq.s32.totalorder %s31, 0
      %p235 = por %p233, %p234
      %p236 = scmp.le.s32.totalorder 1, %s25
      %p237 = scmp.lt.s32.totalorder %s25, 3
      %p238 = pnand %p236, %p237
      %p239 = pneg %p238
      // Predicated region
      $region9: #{tpu_custom_call.1} parent=5 // pred_check
        _
      $region10: #{tpu_custom_call.1} parent=5 // pred_check_branch
        %241 = sbr.rel (%p238) target = $region12
      $region11: #{tpu_custom_call.1} parent=5 // pred_region
        %s242 = ssub.s32 %s25, 1
        // Predicated region
        $region13: #{tpu_custom_call.1} parent=11 // pred_check
          %p243 = pneg %p151
        $region14: #{tpu_custom_call.1} parent=11 // pred_check_branch
          %245 = sbr.rel (%p243) target = $region16
        $region15: #{tpu_custom_call.1} parent=11 // pred_region
          _
        $region16: #{tpu_custom_call.1} parent=11 // pred_fallthru
          _
        // Predicated region
        $region17: #{tpu_custom_call.1} parent=11 // pred_check
          %p246 = pneg %p172
        $region18: #{tpu_custom_call.1} parent=11 // pred_check_branch
          %248 = sbr.rel (%p246) target = $region20
        $region19: #{tpu_custom_call.1} parent=11 // pred_region
          _
        $region20: #{tpu_custom_call.1} parent=11 // pred_fallthru
          _
      $region12: #{tpu_custom_call.1} parent=5 // pred_fallthru
        _
      %p249 = scmp.lt.s32.totalorder %s25, 2
      // Predicated region
      $region21: #{tpu_custom_call.1} parent=5 // pred_check
        %p250 = pneg %p249
      $region22: #{tpu_custom_call.1} parent=5 // pred_check_branch
        %252 = sbr.rel (%p250) target = $region24
      $region23: #{tpu_custom_call.1} parent=5 // pred_region
        // Predicated region
        $region25: #{tpu_custom_call.1} parent=23 // pred_check
          %p253 = pneg %p66
        $region26: #{tpu_custom_call.1} parent=23 // pred_check_branch
          %255 = sbr.rel (%p253) target = $region28
        $region27: #{tpu_custom_call.1} parent=23 // pred_region
          %s256 = sand.u32 %s56, 1
          %s257 = scalar_lea.sflag [#allocation4], %s256
          %s258 = sand.u32 %s56, 1
          %s259 = smul.addr %s258, 16
          %s260 = scalar_lea.vmem [#allocation3], %s259
          %s262 = ssub.s32 256, 256
          %263 = vsyncadd %s257, %s262
          %s264 = smul.addr %s32, 2
          %s265 = sadd.s32 %s34, %s264
          %s266 = smul.addr %s265, 128
          %s267 = scalar_lea.hbm %s0, %s266
          %s268 = sshll.u32 %s260, 4
          %s269 = int_to_ptr.vmem [resolvable:$true] %s268
          %274 = dma.hbm_to_vmem [thread:$0]  %s267, 256, %s269, %s257, 128, 128, 8
        $region28: #{tpu_custom_call.1} parent=23 // pred_fallthru
          _
        // Predicated region
        $region29: #{tpu_custom_call.1} parent=23 // pred_check
          %p275 = pneg %p94
        $region30: #{tpu_custom_call.1} parent=23 // pred_check_branch
          %277 = sbr.rel (%p275) target = $region32
        $region31: #{tpu_custom_call.1} parent=23 // pred_region
          %p278 = scmp.lt.s32.totalorder %s32, 1
          %s279 = scalar_select %p278, %s32, 1
          %p280 = scmp.lt.s32.totalorder %s33, 0
          %s281 = scalar_select %p280, %s33, 0
          %s282 = smul.addr %s279, 3
          %s283 = sadd.s32 %s281, %s282
          %s284 = smul.addr %s283, 8
          %s285 = scalar_lea.vmem %s1, %s284
        $region32: #{tpu_custom_call.1} parent=23 // pred_fallthru
          _
        // Predicated region
        $region33: #{tpu_custom_call.1} parent=23 // pred_check
          %p286 = pneg %p124
        $region34: #{tpu_custom_call.1} parent=23 // pred_check_branch
          %288 = sbr.rel (%p286) target = $region36
        $region35: #{tpu_custom_call.1} parent=23 // pred_region
          %s289 = sand.u32 %s114, 1
          %s290 = scalar_lea.sflag [#allocation7], %s289
          %s291 = sand.u32 %s114, 1
          %s292 = smul.addr %s291, 64
          %s293 = scalar_lea.vmem [#allocation6], %s292
          %s294 = smul.u32 8, %s34
          %s296 = ssub.s32 1024, 1024
          %297 = vsyncadd %s290, %s296
          %s298 = sadd.s32 %s33, %s294
          %s299 = smul.addr %s32, 8
          %s300 = sadd.s32 %s298, %s299
          %s301 = smul.addr %s300, 128
          %s302 = scalar_lea.hbm %s2, %s301
          %s303 = sshll.u32 %s293, 4
          %s304 = int_to_ptr.vmem [resolvable:$true] %s303
          %309 = dma.hbm_to_vmem [thread:$0]  %s302, 1024, %s304, %s290, 128, 128, 8
        $region36: #{tpu_custom_call.1} parent=23 // pred_fallthru
          _
      $region24: #{tpu_custom_call.1} parent=5 // pred_fallthru
        _
      %p310 = scmp.le.s32.totalorder 1, %s25
      %p311 = scmp.lt.s32.totalorder %s25, 3
      %p312 = pnand %p310, %p311
      %p313 = pneg %p312
      // Predicated region
      $region37: #{tpu_custom_call.1} parent=5 // pred_check
        _
      $region38: #{tpu_custom_call.1} parent=5 // pred_check_branch
        %315 = sbr.rel (%p312) target = $region40
      $region39: #{tpu_custom_call.1} parent=5 // pred_region
        %s316 = ssub.s32 %s25, 1
        %s317 = sand.u32 %s59, 1
        %s318 = scalar_lea.sflag [#allocation4], %s317
        %s319 = sand.u32 %s59, 1
        %s320 = smul.addr %s319, 16
        %s321 = scalar_lea.vmem [#allocation3], %s320
        // Predicated region
        $region41: #{tpu_custom_call.1} parent=39 // pred_check
          %p322 = pneg %p72
        $region42: #{tpu_custom_call.1} parent=39 // pred_check_branch
          %324 = sbr.rel (%p322) target = $region44
        $region43: #{tpu_custom_call.1} parent=39 // pred_region
          %325 = dma.done %s318, 256
        $region44: #{tpu_custom_call.1} parent=39 // pred_fallthru
          _
        %s326 = sand.u32 %s117, 1
        %s327 = scalar_lea.sflag [#allocation7], %s326
        %s328 = sand.u32 %s117, 1
        %s329 = smul.addr %s328, 64
        %s330 = scalar_lea.vmem [#allocation6], %s329
        // Predicated region
        $region45: #{tpu_custom_call.1} parent=39 // pred_check
          %p331 = pneg %p130
        $region46: #{tpu_custom_call.1} parent=39 // pred_check_branch
          %333 = sbr.rel (%p331) target = $region48
        $region47: #{tpu_custom_call.1} parent=39 // pred_region
          %334 = dma.done %s327, 1024
        $region48: #{tpu_custom_call.1} parent=39 // pred_fallthru
          _
        %s335 = sand.u32 %s59, 1
        %s336 = scalar_lea.sflag [#allocation4], %s335
        %s337 = sand.u32 %s59, 1
        %s338 = smul.addr %s337, 16
        %s339 = scalar_lea.vmem [#allocation3], %s338
        %p340 = pneg %p72
        %p341 = pneg %p69
        %p342 = scmp.lt.s32.totalorder %s35, 1
        %s343 = scalar_select %p342, %s35, 1
        %p344 = scmp.lt.s32.totalorder %s36, 0
        %s345 = scalar_select %p344, %s36, 0
        %s346 = smul.addr %s343, 3
        %s347 = sadd.s32 %s345, %s346
        %s348 = smul.addr %s347, 8
        %s349 = scalar_lea.vmem %s1, %s348
        %p350 = pneg %p100
        %p351 = pneg %p97
        %s352 = sand.u32 %s117, 1
        %s353 = scalar_lea.sflag [#allocation7], %s352
        %s354 = sand.u32 %s117, 1
        %s355 = smul.addr %s354, 64
        %s356 = scalar_lea.vmem [#allocation6], %s355
        %p357 = pneg %p130
        %p358 = pneg %p127
        %p359 = pneg %p151
        %p360 = pneg %p148
        %p361 = pneg %p172
        %p362 = pneg %p169
        %p363 = pneg %p198
        %p364 = pneg %p195
        %s365 = sand.u32 %s185, 1
        %s366 = scalar_lea.sflag [#allocation5], %s365
        %s367 = sand.u32 %s185, 1
        %s368 = smul.addr %s367, 8
        %s369 = scalar_lea.vmem [#allocation8], %s368
        %p370 = pneg %p228
        %p371 = pneg %p225
        %s372 = sand.u32 %s215, 1
        %s373 = scalar_lea.sflag [#allocation10], %s372
        %s374 = sand.u32 %s215, 1
        %s375 = smul.addr %s374, 64
        %s376 = scalar_lea.vmem [#allocation9], %s375
        %p377 = scmp.lt.s32.totalorder %s35, 1
        %s378 = scalar_select %p377, %s35, 1
        %p379 = scmp.lt.s32.totalorder %s36, 0
        %s380 = scalar_select %p379, %s36, 0
        %s381 = smul.addr %s378, 3
        %s382 = sadd.s32 %s380, %s381
        %s383 = smul.addr %s382, 8
        %s384 = scalar_lea.vmem %s1, %s383
        %s385 = smul.u32 8, %s37
        %s386 = smul.u32 8, %s37
        %p387 = scmp.eq.s32.totalorder %s36, 0
        %p388 = scmp.eq.s32.totalorder %s37, 0
        %p389 = pnand %p387, %p388
        %p390 = pneg %p389
        // Predicated region
        $region49: #{tpu_custom_call.1} parent=39 // pred_check
          _
        $region50: #{tpu_custom_call.1} parent=39 // pred_check_branch
          %392 = sbr.rel (%p389) target = $region52
        $region51: #{tpu_custom_call.1} parent=39 // pred_region
          %vm393 = vcmask 130048
          %394 = vst.msk [vmem:[%s369] sm:$0xff] %vm393, 0.0
        $region52: #{tpu_custom_call.1} parent=39 // pred_fallthru
          _
        %v395 = vld [vmem:[%s321] sm:$0xff]
        %s396 = scalar_lea.vmem %s321, 8 [#allocation3]
        %v397 = vld [vmem:[%s396] sm:$0xff]
        %v398 = vld [vmem:[%s384] sm:$0xff]
        %s399 = scalar_lea.vmem %s384, 8
        %v400 = vld [vmem:[%s399] sm:$0xff]
        %s401 = scalar_lea.vmem %s384, 16
        %v402 = vld [vmem:[%s401] sm:$0xff]
        %v403 = vld [vmem:[%s330] sm:$0xff]
        %v404 = vld [vmem:[%s330 + $0x8] sm:$0xff]
        %v405 = vld [vmem:[%s330 + $0x10] sm:$0xff]
        %v406 = vld [vmem:[%s330 + $0x18] sm:$0xff]
        %v407 = vld [vmem:[%s330 + $0x20] sm:$0xff]
        %v408 = vld [vmem:[%s330 + $0x28] sm:$0xff]
        %v409 = vld [vmem:[%s330 + $0x30] sm:$0xff]
        %v410 = vld [vmem:[%s330 + $0x38] sm:$0xff]
        %v411 = vld [vmem:[%s3] sm:$0xff]
        %v412 = vld [vmem:[%s3 + $0x8] sm:$0xff]
        %v413 = vld [vmem:[%s3 + $0x10] sm:$0xff]
        %v414 = vld [vmem:[%s3 + $0x18] sm:$0xff]
        %v415 = vld [vmem:[%s4] sm:$0x1]
        %v417 = vlaneseq
        %v418 = vshrl.u32 %v417, 7
        %v419 = vsub.s32 0, %v418
        %v420 = vrot.slane %v415, %v419
        %vm422 = vcmask 261120
        %v424 = vsel %vm422, %v403, 0
        %v427 = vsel %vm422, %v404, 0
        %v430 = vsel %vm422, %v405, 0
        %v433 = vsel %vm422, %v406, 0
        %v436 = vsel %vm422, %v407, 0
        %v439 = vsel %vm422, %v408, 0
        %v442 = vsel %vm422, %v409, 0
        %v445 = vsel %vm422, %v410, 0
        %447 = vmatprep.subr.mxu0 0.0
        %v448 = vand.u32 %v411, 4294901760
        %449 = vmatpush1.msra.mxu0 %v448
        %450 = vmatprep.subr.mxu0 0.0
        %v451 = vand.u32 %v412, 4294901760
        %452 = vmatpush1.msra.mxu0 %v451
        %453 = vmatprep.subr.mxu0 0.0
        %v454 = vand.u32 %v413, 4294901760
        %455 = vmatpush1.msra.mxu0 %v454
        %456 = vmatprep.subr.mxu0 0.0
        %v457 = vand.u32 %v414, 4294901760
        %458 = vmatpush1.msra.mxu0 %v457
        %459 = vmatprep.subr.mxu0 0.0
        %460 = vmatpush1.msra.mxu0 0.0
        %461 = vmatprep.subr.mxu0 0.0
        %462 = vmatpush1.msra.mxu0 0.0
        %463 = vmatprep.subr.mxu0 0.0
        %464 = vmatpush1.msra.mxu0 0.0
        %465 = vmatprep.subr.mxu0 0.0
        %466 = vmatpush1.msra.mxu0 0.0
        %467 = vmatprep.subr.mxu0 0.0
        %468 = vmatpush1.msra.mxu0 0.0
        %469 = vmatprep.subr.mxu0 0.0
        %470 = vmatpush1.msra.mxu0 0.0
        %471 = vmatprep.subr.mxu0 0.0
        %472 = vmatpush1.msra.mxu0 0.0
        %473 = vmatprep.subr.mxu0 0.0
        %474 = vmatpush1.msra.mxu0 0.0
        %475 = vmatprep.subr.mxu0 0.0
        %476 = vmatpush1.msra.mxu0 0.0
        %477 = vmatprep.subr.mxu0 0.0
        %478 = vmatpush1.msra.mxu0 0.0
        %479 = vmatprep.subr.mxu0 0.0
        %480 = vmatpush1.msra.mxu0 0.0
        %481 = vmatprep.subr.mxu0 0.0
        %482 = vmatpush1.msra.mxu0 0.0
        %483 = vmatprep.subr.mxu0 0.0
        %484 = vmatpush1.msra.mxu0 0.0
        %485 = vmatprep.subr.mxu0 0.0
        %486 = vmatpush1.msra.mxu0 0.0
        %487 = vmatprep.subr.mxu0 0.0
        %488 = vmatpush1.msra.mxu0 0.0
        %489 = vmatprep.subr.mxu0 0.0
        %490 = vmatpush1.msra.mxu0 0.0
        %491 = vmatprep.subr.mxu0 0.0
        %492 = vmatpush1.msra.mxu0 0.0
        %493 = vmatprep.subr.mxu0 0.0
        %494 = vmatpush1.msra.mxu0 0.0
        %495 = vmatprep.subr.mxu0 0.0
        %496 = vmatpush1.msra.mxu0 0.0
        %497 = vmatprep.subr.mxu0 0.0
        %498 = vmatpush1.msra.mxu0 0.0
        %499 = vmatprep.subr.mxu0 0.0
        %500 = vmatpush1.msra.mxu0 0.0
        %501 = vmatprep.subr.mxu0 0.0
        %502 = vmatpush1.msra.mxu0 0.0
        %503 = vmatprep.subr.mxu0 0.0
        %504 = vmatpush1.msra.mxu0 0.0
        %505 = vmatprep.subr.mxu0 0.0
        %506 = vmatpush1.msra.mxu0 0.0
        %507 = vmatprep.subr.mxu0 0.0
        %508 = vmatpush1.msra.mxu0 0.0
        %509 = vmatprep.subr.mxu0 0.0
        %510 = vmatpush1.msra.mxu0 0.0
        %511 = vmatprep.subr.mxu0 0.0
        %512 = vmatpush1.msra.mxu0 0.0
        %513 = vmatprep.subr.mxu0 0.0
        %514 = vmatpush1.msra.mxu0 0.0
        %515 = vmatprep.mubr.f32.mxu0 0.0
        %v516 = vand.u32 %v424, 4294901760
        %v517 = vsub.f32 %v424, %v516
        %v518 = vand.u32 %v517, 4294901760
        %v519 = vsub.f32 %v517, %v518
        %v520 = vand.u32 %v519, 4294901760
        %521 = vmatmul.mubr.f32.gmra.mrb[0].mxu0 %v520
        %v522 = vpop.f32.mrb[0].mxu0
        %v523 = vadd.f32 %v420, %v522
        %v524 = vpop.f32.mrb[0].mxu0
        %525 = vmatprep.mubr.f32.mxu0 0.0
        %v526 = vand.u32 %v427, 4294901760
        %v527 = vsub.f32 %v427, %v526
        %v528 = vand.u32 %v527, 4294901760
        %v529 = vsub.f32 %v527, %v528
        %v530 = vand.u32 %v529, 4294901760
        %531 = vmatmul.mubr.f32.gmra.mrb[0].mxu0 %v530
        %v532 = vpop.f32.mrb[0].mxu0
        %v533 = vadd.f32 %v420, %v532
        %v534 = vpop.f32.mrb[0].mxu0
        %535 = vmatprep.mubr.f32.mxu0 0.0
        %v536 = vand.u32 %v430, 4294901760
        %v537 = vsub.f32 %v430, %v536
        %v538 = vand.u32 %v537, 4294901760
        %v539 = vsub.f32 %v537, %v538
        %v540 = vand.u32 %v539, 4294901760
        %541 = vmatmul.mubr.f32.gmra.mrb[0].mxu0 %v540
        %v542 = vpop.f32.mrb[0].mxu0
        %v543 = vadd.f32 %v420, %v542
        %v544 = vpop.f32.mrb[0].mxu0
        %545 = vmatprep.mubr.f32.mxu0 0.0
        %v546 = vand.u32 %v433, 4294901760
        %v547 = vsub.f32 %v433, %v546
        %v548 = vand.u32 %v547, 4294901760
        %v549 = vsub.f32 %v547, %v548
        %v550 = vand.u32 %v549, 4294901760
        %551 = vmatmul.mubr.f32.gmra.mrb[0].mxu0 %v550
        %v552 = vpop.f32.mrb[0].mxu0
        %v553 = vadd.f32 %v420, %v552
        %v554 = vpop.f32.mrb[0].mxu0
        %555 = vmatprep.mubr.f32.mxu0 0.0
        %v556 = vand.u32 %v436, 4294901760
        %v557 = vsub.f32 %v436, %v556
        %v558 = vand.u32 %v557, 4294901760
        %v559 = vsub.f32 %v557, %v558
        %v560 = vand.u32 %v559, 4294901760
        %561 = vmatmul.mubr.f32.gmra.mrb[0].mxu0 %v560
        %v562 = vpop.f32.mrb[0].mxu0
        %v563 = vadd.f32 %v420, %v562
        %v564 = vpop.f32.mrb[0].mxu0
        %565 = vmatprep.mubr.f32.mxu0 0.0
        %v566 = vand.u32 %v439, 4294901760
        %v567 = vsub.f32 %v439, %v566
        %v568 = vand.u32 %v567, 4294901760
        %v569 = vsub.f32 %v567, %v568
        %v570 = vand.u32 %v569, 4294901760
        %571 = vmatmul.mubr.f32.gmra.mrb[0].mxu0 %v570
        %v572 = vpop.f32.mrb[0].mxu0
        %v573 = vadd.f32 %v420, %v572
        %v574 = vpop.f32.mrb[0].mxu0
        %575 = vmatprep.mubr.f32.mxu0 0.0
        %v576 = vand.u32 %v442, 4294901760
        %v577 = vsub.f32 %v442, %v576
        %v578 = vand.u32 %v577, 4294901760
        %v579 = vsub.f32 %v577, %v578
        %v580 = vand.u32 %v579, 4294901760
        %581 = vmatmul.mubr.f32.gmra.mrb[0].mxu0 %v580
        %v582 = vpop.f32.mrb[0].mxu0
        %v583 = vadd.f32 %v420, %v582
        %v584 = vpop.f32.mrb[0].mxu0
        %585 = vmatprep.mubr.f32.mxu0 0.0
        %v586 = vand.u32 %v445, 4294901760
        %v587 = vsub.f32 %v445, %v586
        %v588 = vand.u32 %v587, 4294901760
        %v589 = vsub.f32 %v587, %v588
        %v590 = vand.u32 %v589, 4294901760
        %591 = vmatmul.mubr.f32.gmra.mrb[0].mxu0 %v590
        %v592 = vpop.f32.mrb[0].mxu0
        %v593 = vadd.f32 %v420, %v592
        %v594 = vpop.f32.mrb[0].mxu0
        %595 = vdwg.mxu0
        %596 = vmatprep.subr.mxu0 0.0
        %v597 = vand.u32 %v411, 4294901760
        %v598 = vsub.f32 %v411, %v597
        %v599 = vand.u32 %v598, 4294901760
        %v600 = vsub.f32 %v598, %v599
        %v601 = vand.u32 %v600, 4294901760
        %602 = vmatpush1.msra.mxu0 %v601
        %603 = vmatprep.subr.mxu0 0.0
        %v604 = vand.u32 %v412, 4294901760
        %v605 = vsub.f32 %v412, %v604
        %v606 = vand.u32 %v605, 4294901760
        %v607 = vsub.f32 %v605, %v606
        %v608 = vand.u32 %v607, 4294901760
        %609 = vmatpush1.msra.mxu0 %v608
        %610 = vmatprep.subr.mxu0 0.0
        %v611 = vand.u32 %v413, 4294901760
        %v612 = vsub.f32 %v413, %v611
        %v613 = vand.u32 %v612, 4294901760
        %v614 = vsub.f32 %v612, %v613
        %v615 = vand.u32 %v614, 4294901760
        %616 = vmatpush1.msra.mxu0 %v615
        %617 = vmatprep.subr.mxu0 0.0
        %v618 = vand.u32 %v414, 4294901760
        %v619 = vsub.f32 %v414, %v618
        %v620 = vand.u32 %v619, 4294901760
        %v621 = vsub.f32 %v619, %v620
        %v622 = vand.u32 %v621, 4294901760
        %623 = vmatpush1.msra.mxu0 %v622
        %624 = vmatprep.subr.mxu0 0.0
        %625 = vmatpush1.msra.mxu0 0.0
        %626 = vmatprep.subr.mxu0 0.0
        %627 = vmatpush1.msra.mxu0 0.0
        %628 = vmatprep.subr.mxu0 0.0
        %629 = vmatpush1.msra.mxu0 0.0
        %630 = vmatprep.subr.mxu0 0.0
        %631 = vmatpush1.msra.mxu0 0.0
        %632 = vmatprep.subr.mxu0 0.0
        %633 = vmatpush1.msra.mxu0 0.0
        %634 = vmatprep.subr.mxu0 0.0
        %635 = vmatpush1.msra.mxu0 0.0
        %636 = vmatprep.subr.mxu0 0.0
        %637 = vmatpush1.msra.mxu0 0.0
        %638 = vmatprep.subr.mxu0 0.0
        %639 = vmatpush1.msra.mxu0 0.0
        %640 = vmatprep.subr.mxu0 0.0
        %641 = vmatpush1.msra.mxu0 0.0
        %642 = vmatprep.subr.mxu0 0.0
        %643 = vmatpush1.msra.mxu0 0.0
        %644 = vmatprep.subr.mxu0 0.0
        %645 = vmatpush1.msra.mxu0 0.0
        %646 = vmatprep.subr.mxu0 0.0
        %647 = vmatpush1.msra.mxu0 0.0
        %648 = vmatprep.subr.mxu0 0.0
        %649 = vmatpush1.msra.mxu0 0.0
        %650 = vmatprep.subr.mxu0 0.0
        %651 = vmatpush1.msra.mxu0 0.0
        %652 = vmatprep.subr.mxu0 0.0
        %653 = vmatpush1.msra.mxu0 0.0
        %654 = vmatprep.subr.mxu0 0.0
        %655 = vmatpush1.msra.mxu0 0.0
        %656 = vmatprep.subr.mxu0 0.0
        %657 = vmatpush1.msra.mxu0 0.0
        %658 = vmatprep.subr.mxu0 0.0
        %659 = vmatpush1.msra.mxu0 0.0
        %660 = vmatprep.subr.mxu0 0.0
        %661 = vmatpush1.msra.mxu0 0.0
        %662 = vmatprep.subr.mxu0 0.0
        %663 = vmatpush1.msra.mxu0 0.0
        %664 = vmatprep.subr.mxu0 0.0
        %665 = vmatpush1.msra.mxu0 0.0
        %666 = vmatprep.subr.mxu0 0.0
        %667 = vmatpush1.msra.mxu0 0.0
        %668 = vmatprep.subr.mxu0 0.0
        %669 = vmatpush1.msra.mxu0 0.0
        %670 = vmatprep.subr.mxu0 0.0
        %671 = vmatpush1.msra.mxu0 0.0
        %672 = vmatprep.subr.mxu0 0.0
        %673 = vmatpush1.msra.mxu0 0.0
        %674 = vmatprep.subr.mxu0 0.0
        %675 = vmatpush1.msra.mxu0 0.0
        %676 = vmatprep.subr.mxu0 0.0
        %677 = vmatpush1.msra.mxu0 0.0
        %678 = vmatprep.subr.mxu0 0.0
        %679 = vmatpush1.msra.mxu0 0.0
        %680 = vmatprep.mubr.f32.mxu0 0.0
        %v681 = vand.u32 %v424, 4294901760
        %682 = vmatmul.mubr.f32.gmra.mrb[0].mxu0 %v681
        %v683 = vpop.f32.mrb[0].mxu0
        %v684 = vadd.f32 %v523, %v683
        %v685 = vpop.f32.mrb[0].mxu0
        %686 = vmatprep.mubr.f32.mxu0 0.0
        %v687 = vand.u32 %v427, 4294901760
        %688 = vmatmul.mubr.f32.gmra.mrb[0].mxu0 %v687
        %v689 = vpop.f32.mrb[0].mxu0
        %v690 = vadd.f32 %v533, %v689
        %v691 = vpop.f32.mrb[0].mxu0
        %692 = vmatprep.mubr.f32.mxu0 0.0
        %v693 = vand.u32 %v430, 4294901760
        %694 = vmatmul.mubr.f32.gmra.mrb[0].mxu0 %v693
        %v695 = vpop.f32.mrb[0].mxu0
        %v696 = vadd.f32 %v543, %v695
        %v697 = vpop.f32.mrb[0].mxu0
        %698 = vmatprep.mubr.f32.mxu0 0.0
        %v699 = vand.u32 %v433, 4294901760
        %700 = vmatmul.mubr.f32.gmra.mrb[0].mxu0 %v699
        %v701 = vpop.f32.mrb[0].mxu0
        %v702 = vadd.f32 %v553, %v701
        %v703 = vpop.f32.mrb[0].mxu0
        %704 = vmatprep.mubr.f32.mxu0 0.0
        %v705 = vand.u32 %v436, 4294901760
        %706 = vmatmul.mubr.f32.gmra.mrb[0].mxu0 %v705
        %v707 = vpop.f32.mrb[0].mxu0
        %v708 = vadd.f32 %v563, %v707
        %v709 = vpop.f32.mrb[0].mxu0
        %710 = vmatprep.mubr.f32.mxu0 0.0
        %v711 = vand.u32 %v439, 4294901760
        %712 = vmatmul.mubr.f32.gmra.mrb[0].mxu0 %v711
        %v713 = vpop.f32.mrb[0].mxu0
        %v714 = vadd.f32 %v573, %v713
        %v715 = vpop.f32.mrb[0].mxu0
        %716 = vmatprep.mubr.f32.mxu0 0.0
        %v717 = vand.u32 %v442, 4294901760
        %718 = vmatmul.mubr.f32.gmra.mrb[0].mxu0 %v717
        %v719 = vpop.f32.mrb[0].mxu0
        %v720 = vadd.f32 %v583, %v719
        %v721 = vpop.f32.mrb[0].mxu0
        %722 = vmatprep.mubr.f32.mxu0 0.0
        %v723 = vand.u32 %v445, 4294901760
        %724 = vmatmul.mubr.f32.gmra.mrb[0].mxu0 %v723
        %v725 = vpop.f32.mrb[0].mxu0
        %v726 = vadd.f32 %v593, %v725
        %v727 = vpop.f32.mrb[0].mxu0
        %728 = vdwg.mxu0
        %729 = vmatprep.subr.mxu0 0.0
        %v730 = vand.u32 %v411, 4294901760
        %v731 = vsub.f32 %v411, %v730
        %732 = vmatpush1.msra.mxu0 %v731
        %733 = vmatprep.subr.mxu0 0.0
        %v734 = vand.u32 %v412, 4294901760
        %v735 = vsub.f32 %v412, %v734
        %736 = vmatpush1.msra.mxu0 %v735
        %737 = vmatprep.subr.mxu0 0.0
        %v738 = vand.u32 %v413, 4294901760
        %v739 = vsub.f32 %v413, %v738
        %740 = vmatpush1.msra.mxu0 %v739
        %741 = vmatprep.subr.mxu0 0.0
        %v742 = vand.u32 %v414, 4294901760
        %v743 = vsub.f32 %v414, %v742
        %744 = vmatpush1.msra.mxu0 %v743
        %745 = vmatprep.subr.mxu0 0.0
        %746 = vmatpush1.msra.mxu0 0.0
        %747 = vmatprep.subr.mxu0 0.0
        %748 = vmatpush1.msra.mxu0 0.0
        %749 = vmatprep.subr.mxu0 0.0
        %750 = vmatpush1.msra.mxu0 0.0
        %751 = vmatprep.subr.mxu0 0.0
        %752 = vmatpush1.msra.mxu0 0.0
        %753 = vmatprep.subr.mxu0 0.0
        %754 = vmatpush1.msra.mxu0 0.0
        %755 = vmatprep.subr.mxu0 0.0
        %756 = vmatpush1.msra.mxu0 0.0
        %757 = vmatprep.subr.mxu0 0.0
        %758 = vmatpush1.msra.mxu0 0.0
        %759 = vmatprep.subr.mxu0 0.0
        %760 = vmatpush1.msra.mxu0 0.0
        %761 = vmatprep.subr.mxu0 0.0
        %762 = vmatpush1.msra.mxu0 0.0
        %763 = vmatprep.subr.mxu0 0.0
        %764 = vmatpush1.msra.mxu0 0.0
        %765 = vmatprep.subr.mxu0 0.0
        %766 = vmatpush1.msra.mxu0 0.0
        %767 = vmatprep.subr.mxu0 0.0
        %768 = vmatpush1.msra.mxu0 0.0
        %769 = vmatprep.subr.mxu0 0.0
        %770 = vmatpush1.msra.mxu0 0.0
        %771 = vmatprep.subr.mxu0 0.0
        %772 = vmatpush1.msra.mxu0 0.0
        %773 = vmatprep.subr.mxu0 0.0
        %774 = vmatpush1.msra.mxu0 0.0
        %775 = vmatprep.subr.mxu0 0.0
        %776 = vmatpush1.msra.mxu0 0.0
        %777 = vmatprep.subr.mxu0 0.0
        %778 = vmatpush1.msra.mxu0 0.0
        %779 = vmatprep.subr.mxu0 0.0
        %780 = vmatpush1.msra.mxu0 0.0
        %781 = vmatprep.subr.mxu0 0.0
        %782 = vmatpush1.msra.mxu0 0.0
        %783 = vmatprep.subr.mxu0 0.0
        %784 = vmatpush1.msra.mxu0 0.0
        %785 = vmatprep.subr.mxu0 0.0
        %786 = vmatpush1.msra.mxu0 0.0
        %787 = vmatprep.subr.mxu0 0.0
        %788 = vmatpush1.msra.mxu0 0.0
        %789 = vmatprep.subr.mxu0 0.0
        %790 = vmatpush1.msra.mxu0 0.0
        %791 = vmatprep.subr.mxu0 0.0
        %792 = vmatpush1.msra.mxu0 0.0
        %793 = vmatprep.subr.mxu0 0.0
        %794 = vmatpush1.msra.mxu0 0.0
        %795 = vmatprep.subr.mxu0 0.0
        %796 = vmatpush1.msra.mxu0 0.0
        %797 = vmatprep.subr.mxu0 0.0
        %798 = vmatpush1.msra.mxu0 0.0
        %799 = vmatprep.subr.mxu0 0.0
        %800 = vmatpush1.msra.mxu0 0.0
        %801 = vmatprep.mubr.f32.mxu0 0.0
        %v802 = vand.u32 %v424, 4294901760
        %v803 = vsub.f32 %v424, %v802
        %804 = vmatmul.mubr.f32.gmra.mrb[0].mxu0 %v803
        %v805 = vpop.f32.mrb[0].mxu0
        %v806 = vadd.f32 %v684, %v805
        %v807 = vpop.f32.mrb[0].mxu0
        %808 = vmatprep.mubr.f32.mxu0 0.0
        %v809 = vand.u32 %v427, 4294901760
        %v810 = vsub.f32 %v427, %v809
        %811 = vmatmul.mubr.f32.gmra.mrb[0].mxu0 %v810
        %v812 = vpop.f32.mrb[0].mxu0
        %v813 = vadd.f32 %v690, %v812
        %v814 = vpop.f32.mrb[0].mxu0
        %815 = vmatprep.mubr.f32.mxu0 0.0
        %v816 = vand.u32 %v430, 4294901760
        %v817 = vsub.f32 %v430, %v816
        %818 = vmatmul.mubr.f32.gmra.mrb[0].mxu0 %v817
        %v819 = vpop.f32.mrb[0].mxu0
        %v820 = vadd.f32 %v696, %v819
        %v821 = vpop.f32.mrb[0].mxu0
        %822 = vmatprep.mubr.f32.mxu0 0.0
        %v823 = vand.u32 %v433, 4294901760
        %v824 = vsub.f32 %v433, %v823
        %825 = vmatmul.mubr.f32.gmra.mrb[0].mxu0 %v824
        %v826 = vpop.f32.mrb[0].mxu0
        %v827 = vadd.f32 %v702, %v826
        %v828 = vpop.f32.mrb[0].mxu0
        %829 = vmatprep.mubr.f32.mxu0 0.0
        %v830 = vand.u32 %v436, 4294901760
        %v831 = vsub.f32 %v436, %v830
        %832 = vmatmul.mubr.f32.gmra.mrb[0].mxu0 %v831
        %v833 = vpop.f32.mrb[0].mxu0
        %v834 = vadd.f32 %v708, %v833
        %v835 = vpop.f32.mrb[0].mxu0
        %836 = vmatprep.mubr.f32.mxu0 0.0
        %v837 = vand.u32 %v439, 4294901760
        %v838 = vsub.f32 %v439, %v837
        %839 = vmatmul.mubr.f32.gmra.mrb[0].mxu0 %v838
        %v840 = vpop.f32.mrb[0].mxu0
        %v841 = vadd.f32 %v714, %v840
        %v842 = vpop.f32.mrb[0].mxu0
        %843 = vmatprep.mubr.f32.mxu0 0.0
        %v844 = vand.u32 %v442, 4294901760
        %v845 = vsub.f32 %v442, %v844
        %846 = vmatmul.mubr.f32.gmra.mrb[0].mxu0 %v845
        %v847 = vpop.f32.mrb[0].mxu0
        %v848 = vadd.f32 %v720, %v847
        %v849 = vpop.f32.mrb[0].mxu0
        %850 = vmatprep.mubr.f32.mxu0 0.0
        %v851 = vand.u32 %v445, 4294901760
        %v852 = vsub.f32 %v445, %v851
        %853 = vmatmul.mubr.f32.gmra.mrb[0].mxu0 %v852
        %v854 = vpop.f32.mrb[0].mxu0
        %v855 = vadd.f32 %v726, %v854
        %v856 = vpop.f32.mrb[0].mxu0
        %857 = vdwg.mxu0
        %858 = vmatprep.subr.mxu0 0.0
        %v859 = vand.u32 %v411, 4294901760
        %860 = vmatpush1.msra.mxu0 %v859
        %861 = vmatprep.subr.mxu0 0.0
        %v862 = vand.u32 %v412, 4294901760
        %863 = vmatpush1.msra.mxu0 %v862
        %864 = vmatprep.subr.mxu0 0.0
        %v865 = vand.u32 %v413, 4294901760
        %866 = vmatpush1.msra.mxu0 %v865
        %867 = vmatprep.subr.mxu0 0.0
        %v868 = vand.u32 %v414, 4294901760
        %869 = vmatpush1.msra.mxu0 %v868
        %870 = vmatprep.subr.mxu0 0.0
        %871 = vmatpush1.msra.mxu0 0.0
        %872 = vmatprep.subr.mxu0 0.0
        %873 = vmatpush1.msra.mxu0 0.0
        %874 = vmatprep.subr.mxu0 0.0
        %875 = vmatpush1.msra.mxu0 0.0
        %876 = vmatprep.subr.mxu0 0.0
        %877 = vmatpush1.msra.mxu0 0.0
        %878 = vmatprep.subr.mxu0 0.0
        %879 = vmatpush1.msra.mxu0 0.0
        %880 = vmatprep.subr.mxu0 0.0
        %881 = vmatpush1.msra.mxu0 0.0
        %882 = vmatprep.subr.mxu0 0.0
        %883 = vmatpush1.msra.mxu0 0.0
        %884 = vmatprep.subr.mxu0 0.0
        %885 = vmatpush1.msra.mxu0 0.0
        %886 = vmatprep.subr.mxu0 0.0
        %887 = vmatpush1.msra.mxu0 0.0
        %888 = vmatprep.subr.mxu0 0.0
        %889 = vmatpush1.msra.mxu0 0.0
        %890 = vmatprep.subr.mxu0 0.0
        %891 = vmatpush1.msra.mxu0 0.0
        %892 = vmatprep.subr.mxu0 0.0
        %893 = vmatpush1.msra.mxu0 0.0
        %894 = vmatprep.subr.mxu0 0.0
        %895 = vmatpush1.msra.mxu0 0.0
        %896 = vmatprep.subr.mxu0 0.0
        %897 = vmatpush1.msra.mxu0 0.0
        %898 = vmatprep.subr.mxu0 0.0
        %899 = vmatpush1.msra.mxu0 0.0
        %900 = vmatprep.subr.mxu0 0.0
        %901 = vmatpush1.msra.mxu0 0.0
        %902 = vmatprep.subr.mxu0 0.0
        %903 = vmatpush1.msra.mxu0 0.0
        %904 = vmatprep.subr.mxu0 0.0
        %905 = vmatpush1.msra.mxu0 0.0
        %906 = vmatprep.subr.mxu0 0.0
        %907 = vmatpush1.msra.mxu0 0.0
        %908 = vmatprep.subr.mxu0 0.0
        %909 = vmatpush1.msra.mxu0 0.0
        %910 = vmatprep.subr.mxu0 0.0
        %911 = vmatpush1.msra.mxu0 0.0
        %912 = vmatprep.subr.mxu0 0.0
        %913 = vmatpush1.msra.mxu0 0.0
        %914 = vmatprep.subr.mxu0 0.0
        %915 = vmatpush1.msra.mxu0 0.0
        %916 = vmatprep.subr.mxu0 0.0
        %917 = vmatpush1.msra.mxu0 0.0
        %918 = vmatprep.subr.mxu0 0.0
        %919 = vmatpush1.msra.mxu0 0.0
        %920 = vmatprep.subr.mxu0 0.0
        %921 = vmatpush1.msra.mxu0 0.0
        %922 = vmatprep.subr.mxu0 0.0
        %923 = vmatpush1.msra.mxu0 0.0
        %924 = vmatprep.subr.mxu0 0.0
        %925 = vmatpush1.msra.mxu0 0.0
        %926 = vmatprep.mubr.f32.mxu0 0.0
        %v927 = vand.u32 %v424, 4294901760
        %v928 = vsub.f32 %v424, %v927
        %v929 = vand.u32 %v928, 4294901760
        %930 = vmatmul.mubr.f32.gmra.mrb[0].mxu0 %v929
        %v931 = vpop.f32.mrb[0].mxu0
        %v932 = vadd.f32 %v806, %v931
        %v933 = vpop.f32.mrb[0].mxu0
        %934 = vmatprep.mubr.f32.mxu0 0.0
        %v935 = vand.u32 %v427, 4294901760
        %v936 = vsub.f32 %v427, %v935
        %v937 = vand.u32 %v936, 4294901760
        %938 = vmatmul.mubr.f32.gmra.mrb[0].mxu0 %v937
        %v939 = vpop.f32.mrb[0].mxu0
        %v940 = vadd.f32 %v813, %v939
        %v941 = vpop.f32.mrb[0].mxu0
        %942 = vmatprep.mubr.f32.mxu0 0.0
        %v943 = vand.u32 %v430, 4294901760
        %v944 = vsub.f32 %v430, %v943
        %v945 = vand.u32 %v944, 4294901760
        %946 = vmatmul.mubr.f32.gmra.mrb[0].mxu0 %v945
        %v947 = vpop.f32.mrb[0].mxu0
        %v948 = vadd.f32 %v820, %v947
        %v949 = vpop.f32.mrb[0].mxu0
        %950 = vmatprep.mubr.f32.mxu0 0.0
        %v951 = vand.u32 %v433, 4294901760
        %v952 = vsub.f32 %v433, %v951
        %v953 = vand.u32 %v952, 4294901760
        %954 = vmatmul.mubr.f32.gmra.mrb[0].mxu0 %v953
        %v955 = vpop.f32.mrb[0].mxu0
        %v956 = vadd.f32 %v827, %v955
        %v957 = vpop.f32.mrb[0].mxu0
        %958 = vmatprep.mubr.f32.mxu0 0.0
        %v959 = vand.u32 %v436, 4294901760
        %v960 = vsub.f32 %v436, %v959
        %v961 = vand.u32 %v960, 4294901760
        %962 = vmatmul.mubr.f32.gmra.mrb[0].mxu0 %v961
        %v963 = vpop.f32.mrb[0].mxu0
        %v964 = vadd.f32 %v834, %v963
        %v965 = vpop.f32.mrb[0].mxu0
        %966 = vmatprep.mubr.f32.mxu0 0.0
        %v967 = vand.u32 %v439, 4294901760
        %v968 = vsub.f32 %v439, %v967
        %v969 = vand.u32 %v968, 4294901760
        %970 = vmatmul.mubr.f32.gmra.mrb[0].mxu0 %v969
        %v971 = vpop.f32.mrb[0].mxu0
        %v972 = vadd.f32 %v841, %v971
        %v973 = vpop.f32.mrb[0].mxu0
        %974 = vmatprep.mubr.f32.mxu0 0.0
        %v975 = vand.u32 %v442, 4294901760
        %v976 = vsub.f32 %v442, %v975
        %v977 = vand.u32 %v976, 4294901760
        %978 = vmatmul.mubr.f32.gmra.mrb[0].mxu0 %v977
        %v979 = vpop.f32.mrb[0].mxu0
        %v980 = vadd.f32 %v848, %v979
        %v981 = vpop.f32.mrb[0].mxu0
        %982 = vmatprep.mubr.f32.mxu0 0.0
        %v983 = vand.u32 %v445, 4294901760
        %v984 = vsub.f32 %v445, %v983
        %v985 = vand.u32 %v984, 4294901760
        %986 = vmatmul.mubr.f32.gmra.mrb[0].mxu0 %v985
        %v987 = vpop.f32.mrb[0].mxu0
        %v988 = vadd.f32 %v855, %v987
        %v989 = vpop.f32.mrb[0].mxu0
        %990 = vdwg.mxu0
        %991 = vmatprep.subr.mxu0 0.0
        %v992 = vand.u32 %v411, 4294901760
        %v993 = vsub.f32 %v411, %v992
        %v994 = vand.u32 %v993, 4294901760
        %995 = vmatpush1.msra.mxu0 %v994
        %996 = vmatprep.subr.mxu0 0.0
        %v997 = vand.u32 %v412, 4294901760
        %v998 = vsub.f32 %v412, %v997
        %v999 = vand.u32 %v998, 4294901760
        %1000 = vmatpush1.msra.mxu0 %v999
        %1001 = vmatprep.subr.mxu0 0.0
        %v1002 = vand.u32 %v413, 4294901760
        %v1003 = vsub.f32 %v413, %v1002
        %v1004 = vand.u32 %v1003, 4294901760
        %1005 = vmatpush1.msra.mxu0 %v1004
        %1006 = vmatprep.subr.mxu0 0.0
        %v1007 = vand.u32 %v414, 4294901760
        %v1008 = vsub.f32 %v414, %v1007
        %v1009 = vand.u32 %v1008, 4294901760
        %1010 = vmatpush1.msra.mxu0 %v1009
        %1011 = vmatprep.subr.mxu0 0.0
        %1012 = vmatpush1.msra.mxu0 0.0
        %1013 = vmatprep.subr.mxu0 0.0
        %1014 = vmatpush1.msra.mxu0 0.0
        %1015 = vmatprep.subr.mxu0 0.0
        %1016 = vmatpush1.msra.mxu0 0.0
        %1017 = vmatprep.subr.mxu0 0.0
        %1018 = vmatpush1.msra.mxu0 0.0
        %1019 = vmatprep.subr.mxu0 0.0
        %1020 = vmatpush1.msra.mxu0 0.0
        %1021 = vmatprep.subr.mxu0 0.0
        %1022 = vmatpush1.msra.mxu0 0.0
        %1023 = vmatprep.subr.mxu0 0.0
        %1024 = vmatpush1.msra.mxu0 0.0
        %1025 = vmatprep.subr.mxu0 0.0
        %1026 = vmatpush1.msra.mxu0 0.0
        %1027 = vmatprep.subr.mxu0 0.0
        %1028 = vmatpush1.msra.mxu0 0.0
        %1029 = vmatprep.subr.mxu0 0.0
        %1030 = vmatpush1.msra.mxu0 0.0
        %1031 = vmatprep.subr.mxu0 0.0
        %1032 = vmatpush1.msra.mxu0 0.0
        %1033 = vmatprep.subr.mxu0 0.0
        %1034 = vmatpush1.msra.mxu0 0.0
        %1035 = vmatprep.subr.mxu0 0.0
        %1036 = vmatpush1.msra.mxu0 0.0
        %1037 = vmatprep.subr.mxu0 0.0
        %1038 = vmatpush1.msra.mxu0 0.0
        %1039 = vmatprep.subr.mxu0 0.0
        %1040 = vmatpush1.msra.mxu0 0.0
        %1041 = vmatprep.subr.mxu0 0.0
        %1042 = vmatpush1.msra.mxu0 0.0
        %1043 = vmatprep.subr.mxu0 0.0
        %1044 = vmatpush1.msra.mxu0 0.0
        %1045 = vmatprep.subr.mxu0 0.0
        %1046 = vmatpush1.msra.mxu0 0.0
        %1047 = vmatprep.subr.mxu0 0.0
        %1048 = vmatpush1.msra.mxu0 0.0
        %1049 = vmatprep.subr.mxu0 0.0
        %1050 = vmatpush1.msra.mxu0 0.0
        %1051 = vmatprep.subr.mxu0 0.0
        %1052 = vmatpush1.msra.mxu0 0.0
        %1053 = vmatprep.subr.mxu0 0.0
        %1054 = vmatpush1.msra.mxu0 0.0
        %1055 = vmatprep.subr.mxu0 0.0
        %1056 = vmatpush1.msra.mxu0 0.0
        %1057 = vmatprep.subr.mxu0 0.0
        %1058 = vmatpush1.msra.mxu0 0.0
        %1059 = vmatprep.subr.mxu0 0.0
        %1060 = vmatpush1.msra.mxu0 0.0
        %1061 = vmatprep.subr.mxu0 0.0
        %1062 = vmatpush1.msra.mxu0 0.0
        %1063 = vmatprep.subr.mxu0 0.0
        %1064 = vmatpush1.msra.mxu0 0.0
        %1065 = vmatprep.subr.mxu0 0.0
        %1066 = vmatpush1.msra.mxu0 0.0
        %1067 = vmatprep.mubr.f32.mxu0 0.0
        %v1068 = vand.u32 %v424, 4294901760
        %1069 = vmatmul.mubr.f32.gmra.mrb[0].mxu0 %v1068
        %v1070 = vpop.f32.mrb[0].mxu0
        %v1071 = vadd.f32 %v932, %v1070
        %v1072 = vpop.f32.mrb[0].mxu0
        %1073 = vmatprep.mubr.f32.mxu0 0.0
        %v1074 = vand.u32 %v427, 4294901760
        %1075 = vmatmul.mubr.f32.gmra.mrb[0].mxu0 %v1074
        %v1076 = vpop.f32.mrb[0].mxu0
        %v1077 = vadd.f32 %v940, %v1076
        %v1078 = vpop.f32.mrb[0].mxu0
        %1079 = vmatprep.mubr.f32.mxu0 0.0
        %v1080 = vand.u32 %v430, 4294901760
        %1081 = vmatmul.mubr.f32.gmra.mrb[0].mxu0 %v1080
        %v1082 = vpop.f32.mrb[0].mxu0
        %v1083 = vadd.f32 %v948, %v1082
        %v1084 = vpop.f32.mrb[0].mxu0
        %1085 = vmatprep.mubr.f32.mxu0 0.0
        %v1086 = vand.u32 %v433, 4294901760
        %1087 = vmatmul.mubr.f32.gmra.mrb[0].mxu0 %v1086
        %v1088 = vpop.f32.mrb[0].mxu0
        %v1089 = vadd.f32 %v956, %v1088
        %v1090 = vpop.f32.mrb[0].mxu0
        %1091 = vmatprep.mubr.f32.mxu0 0.0
        %v1092 = vand.u32 %v436, 4294901760
        %1093 = vmatmul.mubr.f32.gmra.mrb[0].mxu0 %v1092
        %v1094 = vpop.f32.mrb[0].mxu0
        %v1095 = vadd.f32 %v964, %v1094
        %v1096 = vpop.f32.mrb[0].mxu0
        %1097 = vmatprep.mubr.f32.mxu0 0.0
        %v1098 = vand.u32 %v439, 4294901760
        %1099 = vmatmul.mubr.f32.gmra.mrb[0].mxu0 %v1098
        %v1100 = vpop.f32.mrb[0].mxu0
        %v1101 = vadd.f32 %v972, %v1100
        %v1102 = vpop.f32.mrb[0].mxu0
        %1103 = vmatprep.mubr.f32.mxu0 0.0
        %v1104 = vand.u32 %v442, 4294901760
        %1105 = vmatmul.mubr.f32.gmra.mrb[0].mxu0 %v1104
        %v1106 = vpop.f32.mrb[0].mxu0
        %v1107 = vadd.f32 %v980, %v1106
        %v1108 = vpop.f32.mrb[0].mxu0
        %1109 = vmatprep.mubr.f32.mxu0 0.0
        %v1110 = vand.u32 %v445, 4294901760
        %1111 = vmatmul.mubr.f32.gmra.mrb[0].mxu0 %v1110
        %v1112 = vpop.f32.mrb[0].mxu0
        %v1113 = vadd.f32 %v988, %v1112
        %v1114 = vpop.f32.mrb[0].mxu0
        %1115 = vdwg.mxu0
        %1116 = vmatprep.subr.mxu0 0.0
        %v1117 = vand.u32 %v411, 4294901760
        %1118 = vmatpush1.msra.mxu0 %v1117
        %1119 = vmatprep.subr.mxu0 0.0
        %v1120 = vand.u32 %v412, 4294901760
        %1121 = vmatpush1.msra.mxu0 %v1120
        %1122 = vmatprep.subr.mxu0 0.0
        %v1123 = vand.u32 %v413, 4294901760
        %1124 = vmatpush1.msra.mxu0 %v1123
        %1125 = vmatprep.subr.mxu0 0.0
        %v1126 = vand.u32 %v414, 4294901760
        %1127 = vmatpush1.msra.mxu0 %v1126
        %1128 = vmatprep.subr.mxu0 0.0
        %1129 = vmatpush1.msra.mxu0 0.0
        %1130 = vmatprep.subr.mxu0 0.0
        %1131 = vmatpush1.msra.mxu0 0.0
        %1132 = vmatprep.subr.mxu0 0.0
        %1133 = vmatpush1.msra.mxu0 0.0
        %1134 = vmatprep.subr.mxu0 0.0
        %1135 = vmatpush1.msra.mxu0 0.0
        %1136 = vmatprep.subr.mxu0 0.0
        %1137 = vmatpush1.msra.mxu0 0.0
        %1138 = vmatprep.subr.mxu0 0.0
        %1139 = vmatpush1.msra.mxu0 0.0
        %1140 = vmatprep.subr.mxu0 0.0
        %1141 = vmatpush1.msra.mxu0 0.0
        %1142 = vmatprep.subr.mxu0 0.0
        %1143 = vmatpush1.msra.mxu0 0.0
        %1144 = vmatprep.subr.mxu0 0.0
        %1145 = vmatpush1.msra.mxu0 0.0
        %1146 = vmatprep.subr.mxu0 0.0
        %1147 = vmatpush1.msra.mxu0 0.0
        %1148 = vmatprep.subr.mxu0 0.0
        %1149 = vmatpush1.msra.mxu0 0.0
        %1150 = vmatprep.subr.mxu0 0.0
        %1151 = vmatpush1.msra.mxu0 0.0
        %1152 = vmatprep.subr.mxu0 0.0
        %1153 = vmatpush1.msra.mxu0 0.0
        %1154 = vmatprep.subr.mxu0 0.0
        %1155 = vmatpush1.msra.mxu0 0.0
        %1156 = vmatprep.subr.mxu0 0.0
        %1157 = vmatpush1.msra.mxu0 0.0
        %1158 = vmatprep.subr.mxu0 0.0
        %1159 = vmatpush1.msra.mxu0 0.0
        %1160 = vmatprep.subr.mxu0 0.0
        %1161 = vmatpush1.msra.mxu0 0.0
        %1162 = vmatprep.subr.mxu0 0.0
        %1163 = vmatpush1.msra.mxu0 0.0
        %1164 = vmatprep.subr.mxu0 0.0
        %1165 = vmatpush1.msra.mxu0 0.0
        %1166 = vmatprep.subr.mxu0 0.0
        %1167 = vmatpush1.msra.mxu0 0.0
        %1168 = vmatprep.subr.mxu0 0.0
        %1169 = vmatpush1.msra.mxu0 0.0
        %1170 = vmatprep.subr.mxu0 0.0
        %1171 = vmatpush1.msra.mxu0 0.0
        %1172 = vmatprep.subr.mxu0 0.0
        %1173 = vmatpush1.msra.mxu0 0.0
        %1174 = vmatprep.subr.mxu0 0.0
        %1175 = vmatpush1.msra.mxu0 0.0
        %1176 = vmatprep.subr.mxu0 0.0
        %1177 = vmatpush1.msra.mxu0 0.0
        %1178 = vmatprep.subr.mxu0 0.0
        %1179 = vmatpush1.msra.mxu0 0.0
        %1180 = vmatprep.subr.mxu0 0.0
        %1181 = vmatpush1.msra.mxu0 0.0
        %1182 = vmatprep.subr.mxu0 0.0
        %1183 = vmatpush1.msra.mxu0 0.0
        %1184 = vmatprep.mubr.f32.mxu0 0.0
        %v1185 = vand.u32 %v424, 4294901760
        %1186 = vmatmul.mubr.f32.gmra.mrb[0].mxu0 %v1185
        %v1187 = vpop.f32.mrb[0].mxu0
        %v1188 = vadd.f32 %v1071, %v1187
        %v1189 = vpop.f32.mrb[0].mxu0
        %1190 = vmatprep.mubr.f32.mxu0 0.0
        %v1191 = vand.u32 %v427, 4294901760
        %1192 = vmatmul.mubr.f32.gmra.mrb[0].mxu0 %v1191
        %v1193 = vpop.f32.mrb[0].mxu0
        %v1194 = vadd.f32 %v1077, %v1193
        %v1195 = vpop.f32.mrb[0].mxu0
        %1196 = vmatprep.mubr.f32.mxu0 0.0
        %v1197 = vand.u32 %v430, 4294901760
        %1198 = vmatmul.mubr.f32.gmra.mrb[0].mxu0 %v1197
        %v1199 = vpop.f32.mrb[0].mxu0
        %v1200 = vadd.f32 %v1083, %v1199
        %v1201 = vpop.f32.mrb[0].mxu0
        %1202 = vmatprep.mubr.f32.mxu0 0.0
        %v1203 = vand.u32 %v433, 4294901760
        %1204 = vmatmul.mubr.f32.gmra.mrb[0].mxu0 %v1203
        %v1205 = vpop.f32.mrb[0].mxu0
        %v1206 = vadd.f32 %v1089, %v1205
        %v1207 = vpop.f32.mrb[0].mxu0
        %1208 = vmatprep.mubr.f32.mxu0 0.0
        %v1209 = vand.u32 %v436, 4294901760
        %1210 = vmatmul.mubr.f32.gmra.mrb[0].mxu0 %v1209
        %v1211 = vpop.f32.mrb[0].mxu0
        %v1212 = vadd.f32 %v1095, %v1211
        %v1213 = vpop.f32.mrb[0].mxu0
        %1214 = vmatprep.mubr.f32.mxu0 0.0
        %v1215 = vand.u32 %v439, 4294901760
        %1216 = vmatmul.mubr.f32.gmra.mrb[0].mxu0 %v1215
        %v1217 = vpop.f32.mrb[0].mxu0
        %v1218 = vadd.f32 %v1101, %v1217
        %v1219 = vpop.f32.mrb[0].mxu0
        %1220 = vmatprep.mubr.f32.mxu0 0.0
        %v1221 = vand.u32 %v442, 4294901760
        %1222 = vmatmul.mubr.f32.gmra.mrb[0].mxu0 %v1221
        %v1223 = vpop.f32.mrb[0].mxu0
        %v1224 = vadd.f32 %v1107, %v1223
        %v1225 = vpop.f32.mrb[0].mxu0
        %1226 = vmatprep.mubr.f32.mxu0 0.0
        %v1227 = vand.u32 %v445, 4294901760
        %1228 = vmatmul.mubr.f32.gmra.mrb[0].mxu0 %v1227
        %v1229 = vpop.f32.mrb[0].mxu0
        %v1230 = vadd.f32 %v1113, %v1229
        %v1231 = vpop.f32.mrb[0].mxu0
        %1232 = vdwg.mxu0
        %v1234 = vcombine.high %v397, %v397
        %v1236 = vunpack.c.l.s4 1966171168
        %v1237 = vunpack.c.0.s8 %v1236
        %v1238 = vlaneseq
        %v1239 = vshrl.u32 %v1238, 7
        %v1240 = vsub.s32 %v1237, %v1239
        %v1241 = vrot.slane %v397, %v1240
        %v1243 = vunpack.c.l.s4 1966171168
        %v1244 = vunpack.c.0.s8 %v1243
        %v1245 = vlaneseq
        %v1246 = vshrl.u32 %v1245, 7
        %v1247 = vsub.s32 %v1244, %v1246
        %v1248 = vrot.slane %v1234, %v1247
        %v1249 = vcombine.high %v1241, %v1241
        %v1250 = vcombine.high %v1248, %v1248
        %v1252 = vunpack.c.l.s4 1966171168
        %v1253 = vunpack.c.0.s8 %v1252
        %v1254 = vlaneseq
        %v1255 = vshrl.u32 %v1254, 7
        %v1256 = vsub.s32 %v1253, %v1255
        %v1257 = vrot.slane %v1241, %v1256
        %v1259 = vunpack.c.l.s4 1966171168
        %v1260 = vunpack.c.0.s8 %v1259
        %v1261 = vlaneseq
        %v1262 = vshrl.u32 %v1261, 7
        %v1263 = vsub.s32 %v1260, %v1262
        %v1264 = vrot.slane %v1248, %v1263
        %v1266 = vunpack.c.l.s4 1966171168
        %v1267 = vunpack.c.0.s8 %v1266
        %v1268 = vlaneseq
        %v1269 = vshrl.u32 %v1268, 7
        %v1270 = vsub.s32 %v1267, %v1269
        %v1271 = vrot.slane %v1249, %v1270
        %v1273 = vunpack.c.l.s4 1966171168
        %v1274 = vunpack.c.0.s8 %v1273
        %v1275 = vlaneseq
        %v1276 = vshrl.u32 %v1275, 7
        %v1277 = vsub.s32 %v1274, %v1276
        %v1278 = vrot.slane %v1250, %v1277
        %v1279 = vcombine.high %v1257, %v1257
        %v1280 = vcombine.high %v1264, %v1264
        %v1281 = vcombine.high %v1271, %v1271
        %v1282 = vcombine.high %v1278, %v1278
        %v1283 = vlaneseq
        %v1284 = vshrl.u32 %v1283, 7
        %v1285 = vsub.s32 0, %v1284
        %v1286 = vrot.slane %v1257, %v1285
        %v1287 = vlaneseq
        %v1288 = vshrl.u32 %v1287, 7
        %v1289 = vsub.s32 0, %v1288
        %v1290 = vrot.slane %v1271, %v1289
        %v1291 = vlaneseq
        %v1292 = vshrl.u32 %v1291, 7
        %v1293 = vsub.s32 0, %v1292
        %v1294 = vrot.slane %v1279, %v1293
        %v1295 = vlaneseq
        %v1296 = vshrl.u32 %v1295, 7
        %v1297 = vsub.s32 0, %v1296
        %v1298 = vrot.slane %v1281, %v1297
        %v1299 = vlaneseq
        %v1300 = vshrl.u32 %v1299, 7
        %v1301 = vsub.s32 0, %v1300
        %v1302 = vrot.slane %v1264, %v1301
        %v1303 = vlaneseq
        %v1304 = vshrl.u32 %v1303, 7
        %v1305 = vsub.s32 0, %v1304
        %v1306 = vrot.slane %v1278, %v1305
        %v1307 = vlaneseq
        %v1308 = vshrl.u32 %v1307, 7
        %v1309 = vsub.s32 0, %v1308
        %v1310 = vrot.slane %v1280, %v1309
        %v1311 = vlaneseq
        %v1312 = vshrl.u32 %v1311, 7
        %v1313 = vsub.s32 0, %v1312
        %v1314 = vrot.slane %v1282, %v1313
        %v1323 = vadd.f32 %v1286, %v402
        %v1324 = vadd.f32 %v1290, %v402
        %v1325 = vadd.f32 %v1294, %v402
        %v1326 = vadd.f32 %v1298, %v402
        %v1327 = vadd.f32 %v1302, %v402
        %v1328 = vadd.f32 %v1306, %v402
        %v1329 = vadd.f32 %v1310, %v402
        %v1330 = vadd.f32 %v1314, %v402
        %v1331 = vadd.f32 %v1323, %v1188
        %v1332 = vadd.f32 %v1324, %v1194
        %v1333 = vadd.f32 %v1325, %v1200
        %v1334 = vadd.f32 %v1326, %v1206
        %v1335 = vadd.f32 %v1327, %v1212
        %v1336 = vadd.f32 %v1328, %v1218
        %v1337 = vadd.f32 %v1329, %v1224
        %v1338 = vadd.f32 %v1330, %v1230
        %vm1339 = vcmask 130048
        %1340 = vst.msk [vmem:[%s376] sm:$0xff] %vm1339, %v1331
        %1341 = vst.msk [vmem:[%s376 + $0x8] sm:$0xff] %vm1339, %v1332
        %1342 = vst.msk [vmem:[%s376 + $0x10] sm:$0xff] %vm1339, %v1333
        %1343 = vst.msk [vmem:[%s376 + $0x18] sm:$0xff] %vm1339, %v1334
        %1344 = vst.msk [vmem:[%s376 + $0x20] sm:$0xff] %vm1339, %v1335
        %1345 = vst.msk [vmem:[%s376 + $0x28] sm:$0xff] %vm1339, %v1336
        %1346 = vst.msk [vmem:[%s376 + $0x30] sm:$0xff] %vm1339, %v1337
        %1347 = vst.msk [vmem:[%s376 + $0x38] sm:$0xff] %vm1339, %v1338
        %v1349 = vcombine.high %v395, %v395
        %v1351 = vunpack.c.l.s4 1966171168
        %v1352 = vunpack.c.0.s8 %v1351
        %v1353 = vlaneseq
        %v1354 = vshrl.u32 %v1353, 7
        %v1355 = vsub.s32 %v1352, %v1354
        %v1356 = vrot.slane %v395, %v1355
        %v1358 = vunpack.c.l.s4 1966171168
        %v1359 = vunpack.c.0.s8 %v1358
        %v1360 = vlaneseq
        %v1361 = vshrl.u32 %v1360, 7
        %v1362 = vsub.s32 %v1359, %v1361
        %v1363 = vrot.slane %v1349, %v1362
        %v1364 = vcombine.high %v1356, %v1356
        %v1365 = vcombine.high %v1363, %v1363
        %v1367 = vunpack.c.l.s4 1966171168
        %v1368 = vunpack.c.0.s8 %v1367
        %v1369 = vlaneseq
        %v1370 = vshrl.u32 %v1369, 7
        %v1371 = vsub.s32 %v1368, %v1370
        %v1372 = vrot.slane %v1356, %v1371
        %v1374 = vunpack.c.l.s4 1966171168
        %v1375 = vunpack.c.0.s8 %v1374
        %v1376 = vlaneseq
        %v1377 = vshrl.u32 %v1376, 7
        %v1378 = vsub.s32 %v1375, %v1377
        %v1379 = vrot.slane %v1363, %v1378
        %v1381 = vunpack.c.l.s4 1966171168
        %v1382 = vunpack.c.0.s8 %v1381
        %v1383 = vlaneseq
        %v1384 = vshrl.u32 %v1383, 7
        %v1385 = vsub.s32 %v1382, %v1384
        %v1386 = vrot.slane %v1364, %v1385
        %v1388 = vunpack.c.l.s4 1966171168
        %v1389 = vunpack.c.0.s8 %v1388
        %v1390 = vlaneseq
        %v1391 = vshrl.u32 %v1390, 7
        %v1392 = vsub.s32 %v1389, %v1391
        %v1393 = vrot.slane %v1365, %v1392
        %v1394 = vcombine.high %v1372, %v1372
        %v1395 = vcombine.high %v1379, %v1379
        %v1396 = vcombine.high %v1386, %v1386
        %v1397 = vcombine.high %v1393, %v1393
        %v1398 = vlaneseq
        %v1399 = vshrl.u32 %v1398, 7
        %v1400 = vsub.s32 0, %v1399
        %v1401 = vrot.slane %v1372, %v1400
        %v1402 = vlaneseq
        %v1403 = vshrl.u32 %v1402, 7
        %v1404 = vsub.s32 0, %v1403
        %v1405 = vrot.slane %v1386, %v1404
        %v1406 = vlaneseq
        %v1407 = vshrl.u32 %v1406, 7
        %v1408 = vsub.s32 0, %v1407
        %v1409 = vrot.slane %v1394, %v1408
        %v1410 = vlaneseq
        %v1411 = vshrl.u32 %v1410, 7
        %v1412 = vsub.s32 0, %v1411
        %v1413 = vrot.slane %v1396, %v1412
        %v1414 = vlaneseq
        %v1415 = vshrl.u32 %v1414, 7
        %v1416 = vsub.s32 0, %v1415
        %v1417 = vrot.slane %v1379, %v1416
        %v1418 = vlaneseq
        %v1419 = vshrl.u32 %v1418, 7
        %v1420 = vsub.s32 0, %v1419
        %v1421 = vrot.slane %v1393, %v1420
        %v1422 = vlaneseq
        %v1423 = vshrl.u32 %v1422, 7
        %v1424 = vsub.s32 0, %v1423
        %v1425 = vrot.slane %v1395, %v1424
        %v1426 = vlaneseq
        %v1427 = vshrl.u32 %v1426, 7
        %v1428 = vsub.s32 0, %v1427
        %v1429 = vrot.slane %v1397, %v1428
        %v1438 = vmul.f32 %v1401, %v1331
        %v1439 = vmul.f32 %v1405, %v1332
        %v1440 = vmul.f32 %v1409, %v1333
        %v1441 = vmul.f32 %v1413, %v1334
        %v1442 = vmul.f32 %v1417, %v1335
        %v1443 = vmul.f32 %v1421, %v1336
        %v1444 = vmul.f32 %v1425, %v1337
        %v1445 = vmul.f32 %v1429, %v1338
        %v1446 = vmul.f32 %v1438, %v398
        %v1447 = vmul.f32 %v1439, %v398
        %v1448 = vmul.f32 %v1440, %v398
        %v1449 = vmul.f32 %v1441, %v398
        %v1450 = vmul.f32 %v1442, %v398
        %v1451 = vmul.f32 %v1443, %v398
        %v1452 = vmul.f32 %v1444, %v398
        %v1453 = vmul.f32 %v1445, %v398
        %v1454 = vsel %vm1339, %v1446, 0.0
        %1455 = vadd.xlane.f32.xlu0 %v1454
        %v1456 = vpop.xlane.xlu0 %1455
        %v1457 = vsel %vm1339, %v1447, 0.0
        %1458 = vadd.xlane.f32.xlu0 %v1457
        %v1459 = vpop.xlane.xlu0 %1458
        %v1460 = vsel %vm1339, %v1448, 0.0
        %1461 = vadd.xlane.f32.xlu0 %v1460
        %v1462 = vpop.xlane.xlu0 %1461
        %v1463 = vsel %vm1339, %v1449, 0.0
        %1464 = vadd.xlane.f32.xlu0 %v1463
        %v1465 = vpop.xlane.xlu0 %1464
        %v1466 = vsel %vm1339, %v1450, 0.0
        %1467 = vadd.xlane.f32.xlu0 %v1466
        %v1468 = vpop.xlane.xlu0 %1467
        %v1469 = vsel %vm1339, %v1451, 0.0
        %1470 = vadd.xlane.f32.xlu0 %v1469
        %v1471 = vpop.xlane.xlu0 %1470
        %v1472 = vsel %vm1339, %v1452, 0.0
        %1473 = vadd.xlane.f32.xlu0 %v1472
        %v1474 = vpop.xlane.xlu0 %1473
        %v1475 = vsel %vm1339, %v1453, 0.0
        %1476 = vadd.xlane.f32.xlu0 %v1475
        %v1477 = vpop.xlane.xlu0 %1476
        %s1478 = smul.u32 %s37, 8
        %v1487 = vlaneseq
        %v1488 = vand.u32 %v1487, 127
        %v1489 = vlaneseq
        %v1490 = vshrl.u32 %v1489, 7
        %v1491 = vsub.s32 %v1488, %v1490
        %v1492 = vrot.slane %v1456, %v1491
        %v1493 = vlaneseq
        %v1494 = vshrl.u32 %v1493, 7
        %v1495 = vsub.s32 %v1488, %v1494
        %v1496 = vrot.slane %v1459, %v1495
        %v1497 = vlaneseq
        %v1498 = vshrl.u32 %v1497, 7
        %v1499 = vsub.s32 %v1488, %v1498
        %v1500 = vrot.slane %v1462, %v1499
        %v1501 = vlaneseq
        %v1502 = vshrl.u32 %v1501, 7
        %v1503 = vsub.s32 %v1488, %v1502
        %v1504 = vrot.slane %v1465, %v1503
        %v1505 = vlaneseq
        %v1506 = vshrl.u32 %v1505, 7
        %v1507 = vsub.s32 %v1488, %v1506
        %v1508 = vrot.slane %v1468, %v1507
        %v1509 = vlaneseq
        %v1510 = vshrl.u32 %v1509, 7
        %v1511 = vsub.s32 %v1488, %v1510
        %v1512 = vrot.slane %v1471, %v1511
        %v1513 = vlaneseq
        %v1514 = vshrl.u32 %v1513, 7
        %v1515 = vsub.s32 %v1488, %v1514
        %v1516 = vrot.slane %v1474, %v1515
        %v1517 = vlaneseq
        %v1518 = vshrl.u32 %v1517, 7
        %v1519 = vsub.s32 %v1488, %v1518
        %v1520 = vrot.slane %v1477, %v1519
        %vm1521 = vcmask 1041409
        %v1522 = vsel %vm1521, %v1496, %v1492
        %vm1523 = vcmask 1042434
        %v1524 = vsel %vm1523, %v1500, %v1522
        %vm1525 = vcmask 1043459
        %v1526 = vsel %vm1525, %v1504, %v1524
        %vm1527 = vcmask 1044484
        %v1528 = vsel %vm1527, %v1508, %v1526
        %vm1529 = vcmask 1045509
        %v1530 = vsel %vm1529, %v1512, %v1528
        %vm1531 = vcmask 1046534
        %v1532 = vsel %vm1531, %v1516, %v1530
        %vm1533 = vcmask 1047559
        %v1534 = vsel %vm1533, %v1520, %v1532
        %s1536 = scalar_lea.vmem [#allocation2], %s1478
        %vm1537 = vcmask 64512
        %1538 = vst.msk [vmem:[%s1536] sm:$0xff] %vm1537, %v1534
        // Predicated region
        $region53: #{tpu_custom_call.1} parent=39 // pred_check
          %p1539 = pneg %p388
        $region54: #{tpu_custom_call.1} parent=39 // pred_check_branch
          %1541 = sbr.rel (%p1539) target = $region56
        $region55: #{tpu_custom_call.1} parent=39 // pred_region
          %v1542 = vld [vmem:[#allocation2] sm:$0xff]
          %v1543 = vsel %vm1537, %v1542, -inf
          %v1544 = vrot.slane %v1543, 4
          %v1545 = vmax.f32 %v1543, %v1544
          %v1546 = vrot.slane %v1545, 2
          %v1547 = vmax.f32 %v1545, %v1546
          %v1548 = vrot.slane %v1547, 1
          %v1549 = vmax.f32 %v1547, %v1548
          %v1550 = vsub.f32 %v1542, %v1549
          %v1551 = vmul.f32 %v1550, 1.442695
          %v1552 = vpow.pop %v1551
          %v1553 = vsel %vm1537, %v1552, 0.0
          %v1554 = vrot.slane %v1553, 4
          %v1555 = vadd.f32 %v1553, %v1554
          %v1556 = vrot.slane %v1555, 2
          %v1557 = vadd.f32 %v1555, %v1556
          %v1558 = vrot.slane %v1557, 1
          %v1559 = vadd.f32 %v1557, %v1558
          %v1560 = vrcp.pop %v1559
          %v1561 = vmul.f32 %v1552, %v1560
          %v1562 = vld [vmem:[%s369] sm:$0xff]
          %v1564 = vsel %vm1537, %v1561, 0
          %1566 = vmatprep.subr.mxu0 0.0
          %v1567 = vand.u32 %v400, 4294901760
          %1568 = vmatpush1.msra.mxu0 %v1567
          %1569 = vmatprep.subr.mxu0 0.0
          %1570 = vmatpush1.msra.mxu0 0.0
          %1571 = vmatprep.subr.mxu0 0.0
          %1572 = vmatpush1.msra.mxu0 0.0
          %1573 = vmatprep.subr.mxu0 0.0
          %1574 = vmatpush1.msra.mxu0 0.0
          %1575 = vmatprep.subr.mxu0 0.0
          %1576 = vmatpush1.msra.mxu0 0.0
          %1577 = vmatprep.subr.mxu0 0.0
          %1578 = vmatpush1.msra.mxu0 0.0
          %1579 = vmatprep.subr.mxu0 0.0
          %1580 = vmatpush1.msra.mxu0 0.0
          %1581 = vmatprep.subr.mxu0 0.0
          %1582 = vmatpush1.msra.mxu0 0.0
          %1583 = vmatprep.subr.mxu0 0.0
          %1584 = vmatpush1.msra.mxu0 0.0
          %1585 = vmatprep.subr.mxu0 0.0
          %1586 = vmatpush1.msra.mxu0 0.0
          %1587 = vmatprep.subr.mxu0 0.0
          %1588 = vmatpush1.msra.mxu0 0.0
          %1589 = vmatprep.subr.mxu0 0.0
          %1590 = vmatpush1.msra.mxu0 0.0
          %1591 = vmatprep.subr.mxu0 0.0
          %1592 = vmatpush1.msra.mxu0 0.0
          %1593 = vmatprep.subr.mxu0 0.0
          %1594 = vmatpush1.msra.mxu0 0.0
          %1595 = vmatprep.subr.mxu0 0.0
          %1596 = vmatpush1.msra.mxu0 0.0
          %1597 = vmatprep.subr.mxu0 0.0
          %1598 = vmatpush1.msra.mxu0 0.0
          %1599 = vmatprep.subr.mxu0 0.0
          %1600 = vmatpush1.msra.mxu0 0.0
          %1601 = vmatprep.subr.mxu0 0.0
          %1602 = vmatpush1.msra.mxu0 0.0
          %1603 = vmatprep.subr.mxu0 0.0
          %1604 = vmatpush1.msra.mxu0 0.0
          %1605 = vmatprep.subr.mxu0 0.0
          %1606 = vmatpush1.msra.mxu0 0.0
          %1607 = vmatprep.subr.mxu0 0.0
          %1608 = vmatpush1.msra.mxu0 0.0
          %1609 = vmatprep.subr.mxu0 0.0
          %1610 = vmatpush1.msra.mxu0 0.0
          %1611 = vmatprep.subr.mxu0 0.0
          %1612 = vmatpush1.msra.mxu0 0.0
          %1613 = vmatprep.subr.mxu0 0.0
          %1614 = vmatpush1.msra.mxu0 0.0
          %1615 = vmatprep.subr.mxu0 0.0
          %1616 = vmatpush1.msra.mxu0 0.0
          %1617 = vmatprep.subr.mxu0 0.0
          %1618 = vmatpush1.msra.mxu0 0.0
          %1619 = vmatprep.subr.mxu0 0.0
          %1620 = vmatpush1.msra.mxu0 0.0
          %1621 = vmatprep.subr.mxu0 0.0
          %1622 = vmatpush1.msra.mxu0 0.0
          %1623 = vmatprep.subr.mxu0 0.0
          %1624 = vmatpush1.msra.mxu0 0.0
          %1625 = vmatprep.subr.mxu0 0.0
          %1626 = vmatpush1.msra.mxu0 0.0
          %1627 = vmatprep.subr.mxu0 0.0
          %1628 = vmatpush1.msra.mxu0 0.0
          %1629 = vmatprep.subr.mxu0 0.0
          %1630 = vmatpush1.msra.mxu0 0.0
          %1631 = vmatprep.mubr.f32.mxu0 0.0
          %v1632 = vand.u32 %v1564, 4294901760
          %v1633 = vsub.f32 %v1564, %v1632
          %v1634 = vand.u32 %v1633, 4294901760
          %v1635 = vsub.f32 %v1633, %v1634
          %v1636 = vand.u32 %v1635, 4294901760
          %1637 = vmatmul.mubr.f32.gmra.mrb[0].mxu0 %v1636
          %v1638 = vpop.f32.mrb[0].mxu0
          %v1639 = vadd.f32 0.0, %v1638
          %v1640 = vpop.f32.mrb[0].mxu0
          %1641 = vdwg.mxu0
          %1642 = vmatprep.subr.mxu0 0.0
          %v1643 = vand.u32 %v400, 4294901760
          %v1644 = vsub.f32 %v400, %v1643
          %v1645 = vand.u32 %v1644, 4294901760
          %v1646 = vsub.f32 %v1644, %v1645
          %v1647 = vand.u32 %v1646, 4294901760
          %1648 = vmatpush1.msra.mxu0 %v1647
          %1649 = vmatprep.subr.mxu0 0.0
          %1650 = vmatpush1.msra.mxu0 0.0
          %1651 = vmatprep.subr.mxu0 0.0
          %1652 = vmatpush1.msra.mxu0 0.0
          %1653 = vmatprep.subr.mxu0 0.0
          %1654 = vmatpush1.msra.mxu0 0.0
          %1655 = vmatprep.subr.mxu0 0.0
          %1656 = vmatpush1.msra.mxu0 0.0
          %1657 = vmatprep.subr.mxu0 0.0
          %1658 = vmatpush1.msra.mxu0 0.0
          %1659 = vmatprep.subr.mxu0 0.0
          %1660 = vmatpush1.msra.mxu0 0.0
          %1661 = vmatprep.subr.mxu0 0.0
          %1662 = vmatpush1.msra.mxu0 0.0
          %1663 = vmatprep.subr.mxu0 0.0
          %1664 = vmatpush1.msra.mxu0 0.0
          %1665 = vmatprep.subr.mxu0 0.0
          %1666 = vmatpush1.msra.mxu0 0.0
          %1667 = vmatprep.subr.mxu0 0.0
          %1668 = vmatpush1.msra.mxu0 0.0
          %1669 = vmatprep.subr.mxu0 0.0
          %1670 = vmatpush1.msra.mxu0 0.0
          %1671 = vmatprep.subr.mxu0 0.0
          %1672 = vmatpush1.msra.mxu0 0.0
          %1673 = vmatprep.subr.mxu0 0.0
          %1674 = vmatpush1.msra.mxu0 0.0
          %1675 = vmatprep.subr.mxu0 0.0
          %1676 = vmatpush1.msra.mxu0 0.0
          %1677 = vmatprep.subr.mxu0 0.0
          %1678 = vmatpush1.msra.mxu0 0.0
          %1679 = vmatprep.subr.mxu0 0.0
          %1680 = vmatpush1.msra.mxu0 0.0
          %1681 = vmatprep.subr.mxu0 0.0
          %1682 = vmatpush1.msra.mxu0 0.0
          %1683 = vmatprep.subr.mxu0 0.0
          %1684 = vmatpush1.msra.mxu0 0.0
          %1685 = vmatprep.subr.mxu0 0.0
          %1686 = vmatpush1.msra.mxu0 0.0
          %1687 = vmatprep.subr.mxu0 0.0
          %1688 = vmatpush1.msra.mxu0 0.0
          %1689 = vmatprep.subr.mxu0 0.0
          %1690 = vmatpush1.msra.mxu0 0.0
          %1691 = vmatprep.subr.mxu0 0.0
          %1692 = vmatpush1.msra.mxu0 0.0
          %1693 = vmatprep.subr.mxu0 0.0
          %1694 = vmatpush1.msra.mxu0 0.0
          %1695 = vmatprep.subr.mxu0 0.0
          %1696 = vmatpush1.msra.mxu0 0.0
          %1697 = vmatprep.subr.mxu0 0.0
          %1698 = vmatpush1.msra.mxu0 0.0
          %1699 = vmatprep.subr.mxu0 0.0
          %1700 = vmatpush1.msra.mxu0 0.0
          %1701 = vmatprep.subr.mxu0 0.0
          %1702 = vmatpush1.msra.mxu0 0.0
          %1703 = vmatprep.subr.mxu0 0.0
          %1704 = vmatpush1.msra.mxu0 0.0
          %1705 = vmatprep.subr.mxu0 0.0
          %1706 = vmatpush1.msra.mxu0 0.0
          %1707 = vmatprep.subr.mxu0 0.0
          %1708 = vmatpush1.msra.mxu0 0.0
          %1709 = vmatprep.subr.mxu0 0.0
          %1710 = vmatpush1.msra.mxu0 0.0
          %1711 = vmatprep.mubr.f32.mxu0 0.0
          %v1712 = vand.u32 %v1564, 4294901760
          %1713 = vmatmul.mubr.f32.gmra.mrb[0].mxu0 %v1712
          %v1714 = vpop.f32.mrb[0].mxu0
          %v1715 = vadd.f32 %v1639, %v1714
          %v1716 = vpop.f32.mrb[0].mxu0
          %1717 = vdwg.mxu0
          %1718 = vmatprep.subr.mxu0 0.0
          %v1719 = vand.u32 %v400, 4294901760
          %v1720 = vsub.f32 %v400, %v1719
          %1721 = vmatpush1.msra.mxu0 %v1720
          %1722 = vmatprep.subr.mxu0 0.0
          %1723 = vmatpush1.msra.mxu0 0.0
          %1724 = vmatprep.subr.mxu0 0.0
          %1725 = vmatpush1.msra.mxu0 0.0
          %1726 = vmatprep.subr.mxu0 0.0
          %1727 = vmatpush1.msra.mxu0 0.0
          %1728 = vmatprep.subr.mxu0 0.0
          %1729 = vmatpush1.msra.mxu0 0.0
          %1730 = vmatprep.subr.mxu0 0.0
          %1731 = vmatpush1.msra.mxu0 0.0
          %1732 = vmatprep.subr.mxu0 0.0
          %1733 = vmatpush1.msra.mxu0 0.0
          %1734 = vmatprep.subr.mxu0 0.0
          %1735 = vmatpush1.msra.mxu0 0.0
          %1736 = vmatprep.subr.mxu0 0.0
          %1737 = vmatpush1.msra.mxu0 0.0
          %1738 = vmatprep.subr.mxu0 0.0
          %1739 = vmatpush1.msra.mxu0 0.0
          %1740 = vmatprep.subr.mxu0 0.0
          %1741 = vmatpush1.msra.mxu0 0.0
          %1742 = vmatprep.subr.mxu0 0.0
          %1743 = vmatpush1.msra.mxu0 0.0
          %1744 = vmatprep.subr.mxu0 0.0
          %1745 = vmatpush1.msra.mxu0 0.0
          %1746 = vmatprep.subr.mxu0 0.0
          %1747 = vmatpush1.msra.mxu0 0.0
          %1748 = vmatprep.subr.mxu0 0.0
          %1749 = vmatpush1.msra.mxu0 0.0
          %1750 = vmatprep.subr.mxu0 0.0
          %1751 = vmatpush1.msra.mxu0 0.0
          %1752 = vmatprep.subr.mxu0 0.0
          %1753 = vmatpush1.msra.mxu0 0.0
          %1754 = vmatprep.subr.mxu0 0.0
          %1755 = vmatpush1.msra.mxu0 0.0
          %1756 = vmatprep.subr.mxu0 0.0
          %1757 = vmatpush1.msra.mxu0 0.0
          %1758 = vmatprep.subr.mxu0 0.0
          %1759 = vmatpush1.msra.mxu0 0.0
          %1760 = vmatprep.subr.mxu0 0.0
          %1761 = vmatpush1.msra.mxu0 0.0
          %1762 = vmatprep.subr.mxu0 0.0
          %1763 = vmatpush1.msra.mxu0 0.0
          %1764 = vmatprep.subr.mxu0 0.0
          %1765 = vmatpush1.msra.mxu0 0.0
          %1766 = vmatprep.subr.mxu0 0.0
          %1767 = vmatpush1.msra.mxu0 0.0
          %1768 = vmatprep.subr.mxu0 0.0
          %1769 = vmatpush1.msra.mxu0 0.0
          %1770 = vmatprep.subr.mxu0 0.0
          %1771 = vmatpush1.msra.mxu0 0.0
          %1772 = vmatprep.subr.mxu0 0.0
          %1773 = vmatpush1.msra.mxu0 0.0
          %1774 = vmatprep.subr.mxu0 0.0
          %1775 = vmatpush1.msra.mxu0 0.0
          %1776 = vmatprep.subr.mxu0 0.0
          %1777 = vmatpush1.msra.mxu0 0.0
          %1778 = vmatprep.subr.mxu0 0.0
          %1779 = vmatpush1.msra.mxu0 0.0
          %1780 = vmatprep.subr.mxu0 0.0
          %1781 = vmatpush1.msra.mxu0 0.0
          %1782 = vmatprep.subr.mxu0 0.0
          %1783 = vmatpush1.msra.mxu0 0.0
          %1784 = vmatprep.mubr.f32.mxu0 0.0
          %v1785 = vand.u32 %v1564, 4294901760
          %v1786 = vsub.f32 %v1564, %v1785
          %1787 = vmatmul.mubr.f32.gmra.mrb[0].mxu0 %v1786
          %v1788 = vpop.f32.mrb[0].mxu0
          %v1789 = vadd.f32 %v1715, %v1788
          %v1790 = vpop.f32.mrb[0].mxu0
          %1791 = vdwg.mxu0
          %1792 = vmatprep.subr.mxu0 0.0
          %v1793 = vand.u32 %v400, 4294901760
          %1794 = vmatpush1.msra.mxu0 %v1793
          %1795 = vmatprep.subr.mxu0 0.0
          %1796 = vmatpush1.msra.mxu0 0.0
          %1797 = vmatprep.subr.mxu0 0.0
          %1798 = vmatpush1.msra.mxu0 0.0
          %1799 = vmatprep.subr.mxu0 0.0
          %1800 = vmatpush1.msra.mxu0 0.0
          %1801 = vmatprep.subr.mxu0 0.0
          %1802 = vmatpush1.msra.mxu0 0.0
          %1803 = vmatprep.subr.mxu0 0.0
          %1804 = vmatpush1.msra.mxu0 0.0
          %1805 = vmatprep.subr.mxu0 0.0
          %1806 = vmatpush1.msra.mxu0 0.0
          %1807 = vmatprep.subr.mxu0 0.0
          %1808 = vmatpush1.msra.mxu0 0.0
          %1809 = vmatprep.subr.mxu0 0.0
          %1810 = vmatpush1.msra.mxu0 0.0
          %1811 = vmatprep.subr.mxu0 0.0
          %1812 = vmatpush1.msra.mxu0 0.0
          %1813 = vmatprep.subr.mxu0 0.0
          %1814 = vmatpush1.msra.mxu0 0.0
          %1815 = vmatprep.subr.mxu0 0.0
          %1816 = vmatpush1.msra.mxu0 0.0
          %1817 = vmatprep.subr.mxu0 0.0
          %1818 = vmatpush1.msra.mxu0 0.0
          %1819 = vmatprep.subr.mxu0 0.0
          %1820 = vmatpush1.msra.mxu0 0.0
          %1821 = vmatprep.subr.mxu0 0.0
          %1822 = vmatpush1.msra.mxu0 0.0
          %1823 = vmatprep.subr.mxu0 0.0
          %1824 = vmatpush1.msra.mxu0 0.0
          %1825 = vmatprep.subr.mxu0 0.0
          %1826 = vmatpush1.msra.mxu0 0.0
          %1827 = vmatprep.subr.mxu0 0.0
          %1828 = vmatpush1.msra.mxu0 0.0
          %1829 = vmatprep.subr.mxu0 0.0
          %1830 = vmatpush1.msra.mxu0 0.0
          %1831 = vmatprep.subr.mxu0 0.0
          %1832 = vmatpush1.msra.mxu0 0.0
          %1833 = vmatprep.subr.mxu0 0.0
          %1834 = vmatpush1.msra.mxu0 0.0
          %1835 = vmatprep.subr.mxu0 0.0
          %1836 = vmatpush1.msra.mxu0 0.0
          %1837 = vmatprep.subr.mxu0 0.0
          %1838 = vmatpush1.msra.mxu0 0.0
          %1839 = vmatprep.subr.mxu0 0.0
          %1840 = vmatpush1.msra.mxu0 0.0
          %1841 = vmatprep.subr.mxu0 0.0
          %1842 = vmatpush1.msra.mxu0 0.0
          %1843 = vmatprep.subr.mxu0 0.0
          %1844 = vmatpush1.msra.mxu0 0.0
          %1845 = vmatprep.subr.mxu0 0.0
          %1846 = vmatpush1.msra.mxu0 0.0
          %1847 = vmatprep.subr.mxu0 0.0
          %1848 = vmatpush1.msra.mxu0 0.0
          %1849 = vmatprep.subr.mxu0 0.0
          %1850 = vmatpush1.msra.mxu0 0.0
          %1851 = vmatprep.subr.mxu0 0.0
          %1852 = vmatpush1.msra.mxu0 0.0
          %1853 = vmatprep.subr.mxu0 0.0
          %1854 = vmatpush1.msra.mxu0 0.0
          %1855 = vmatprep.subr.mxu0 0.0
          %1856 = vmatpush1.msra.mxu0 0.0
          %1857 = vmatprep.mubr.f32.mxu0 0.0
          %v1858 = vand.u32 %v1564, 4294901760
          %v1859 = vsub.f32 %v1564, %v1858
          %v1860 = vand.u32 %v1859, 4294901760
          %1861 = vmatmul.mubr.f32.gmra.mrb[0].mxu0 %v1860
          %v1862 = vpop.f32.mrb[0].mxu0
          %v1863 = vadd.f32 %v1789, %v1862
          %v1864 = vpop.f32.mrb[0].mxu0
          %1865 = vdwg.mxu0
          %1866 = vmatprep.subr.mxu0 0.0
          %v1867 = vand.u32 %v400, 4294901760
          %v1868 = vsub.f32 %v400, %v1867
          %v1869 = vand.u32 %v1868, 4294901760
          %1870 = vmatpush1.msra.mxu0 %v1869
          %1871 = vmatprep.subr.mxu0 0.0
          %1872 = vmatpush1.msra.mxu0 0.0
          %1873 = vmatprep.subr.mxu0 0.0
          %1874 = vmatpush1.msra.mxu0 0.0
          %1875 = vmatprep.subr.mxu0 0.0
          %1876 = vmatpush1.msra.mxu0 0.0
          %1877 = vmatprep.subr.mxu0 0.0
          %1878 = vmatpush1.msra.mxu0 0.0
          %1879 = vmatprep.subr.mxu0 0.0
          %1880 = vmatpush1.msra.mxu0 0.0
          %1881 = vmatprep.subr.mxu0 0.0
          %1882 = vmatpush1.msra.mxu0 0.0
          %1883 = vmatprep.subr.mxu0 0.0
          %1884 = vmatpush1.msra.mxu0 0.0
          %1885 = vmatprep.subr.mxu0 0.0
          %1886 = vmatpush1.msra.mxu0 0.0
          %1887 = vmatprep.subr.mxu0 0.0
          %1888 = vmatpush1.msra.mxu0 0.0
          %1889 = vmatprep.subr.mxu0 0.0
          %1890 = vmatpush1.msra.mxu0 0.0
          %1891 = vmatprep.subr.mxu0 0.0
          %1892 = vmatpush1.msra.mxu0 0.0
          %1893 = vmatprep.subr.mxu0 0.0
          %1894 = vmatpush1.msra.mxu0 0.0
          %1895 = vmatprep.subr.mxu0 0.0
          %1896 = vmatpush1.msra.mxu0 0.0
          %1897 = vmatprep.subr.mxu0 0.0
          %1898 = vmatpush1.msra.mxu0 0.0
          %1899 = vmatprep.subr.mxu0 0.0
          %1900 = vmatpush1.msra.mxu0 0.0
          %1901 = vmatprep.subr.mxu0 0.0
          %1902 = vmatpush1.msra.mxu0 0.0
          %1903 = vmatprep.subr.mxu0 0.0
          %1904 = vmatpush1.msra.mxu0 0.0
          %1905 = vmatprep.subr.mxu0 0.0
          %1906 = vmatpush1.msra.mxu0 0.0
          %1907 = vmatprep.subr.mxu0 0.0
          %1908 = vmatpush1.msra.mxu0 0.0
          %1909 = vmatprep.subr.mxu0 0.0
          %1910 = vmatpush1.msra.mxu0 0.0
          %1911 = vmatprep.subr.mxu0 0.0
          %1912 = vmatpush1.msra.mxu0 0.0
          %1913 = vmatprep.subr.mxu0 0.0
          %1914 = vmatpush1.msra.mxu0 0.0
          %1915 = vmatprep.subr.mxu0 0.0
          %1916 = vmatpush1.msra.mxu0 0.0
          %1917 = vmatprep.subr.mxu0 0.0
          %1918 = vmatpush1.msra.mxu0 0.0
          %1919 = vmatprep.subr.mxu0 0.0
          %1920 = vmatpush1.msra.mxu0 0.0
          %1921 = vmatprep.subr.mxu0 0.0
          %1922 = vmatpush1.msra.mxu0 0.0
          %1923 = vmatprep.subr.mxu0 0.0
          %1924 = vmatpush1.msra.mxu0 0.0
          %1925 = vmatprep.subr.mxu0 0.0
          %1926 = vmatpush1.msra.mxu0 0.0
          %1927 = vmatprep.subr.mxu0 0.0
          %1928 = vmatpush1.msra.mxu0 0.0
          %1929 = vmatprep.subr.mxu0 0.0
          %1930 = vmatpush1.msra.mxu0 0.0
          %1931 = vmatprep.subr.mxu0 0.0
          %1932 = vmatpush1.msra.mxu0 0.0
          %1933 = vmatprep.mubr.f32.mxu0 0.0
          %v1934 = vand.u32 %v1564, 4294901760
          %1935 = vmatmul.mubr.f32.gmra.mrb[0].mxu0 %v1934
          %v1936 = vpop.f32.mrb[0].mxu0
          %v1937 = vadd.f32 %v1863, %v1936
          %v1938 = vpop.f32.mrb[0].mxu0
          %1939 = vdwg.mxu0
          %1940 = vmatprep.subr.mxu0 0.0
          %v1941 = vand.u32 %v400, 4294901760
          %1942 = vmatpush1.msra.mxu0 %v1941
          %1943 = vmatprep.subr.mxu0 0.0
          %1944 = vmatpush1.msra.mxu0 0.0
          %1945 = vmatprep.subr.mxu0 0.0
          %1946 = vmatpush1.msra.mxu0 0.0
          %1947 = vmatprep.subr.mxu0 0.0
          %1948 = vmatpush1.msra.mxu0 0.0
          %1949 = vmatprep.subr.mxu0 0.0
          %1950 = vmatpush1.msra.mxu0 0.0
          %1951 = vmatprep.subr.mxu0 0.0
          %1952 = vmatpush1.msra.mxu0 0.0
          %1953 = vmatprep.subr.mxu0 0.0
          %1954 = vmatpush1.msra.mxu0 0.0
          %1955 = vmatprep.subr.mxu0 0.0
          %1956 = vmatpush1.msra.mxu0 0.0
          %1957 = vmatprep.subr.mxu0 0.0
          %1958 = vmatpush1.msra.mxu0 0.0
          %1959 = vmatprep.subr.mxu0 0.0
          %1960 = vmatpush1.msra.mxu0 0.0
          %1961 = vmatprep.subr.mxu0 0.0
          %1962 = vmatpush1.msra.mxu0 0.0
          %1963 = vmatprep.subr.mxu0 0.0
          %1964 = vmatpush1.msra.mxu0 0.0
          %1965 = vmatprep.subr.mxu0 0.0
          %1966 = vmatpush1.msra.mxu0 0.0
          %1967 = vmatprep.subr.mxu0 0.0
          %1968 = vmatpush1.msra.mxu0 0.0
          %1969 = vmatprep.subr.mxu0 0.0
          %1970 = vmatpush1.msra.mxu0 0.0
          %1971 = vmatprep.subr.mxu0 0.0
          %1972 = vmatpush1.msra.mxu0 0.0
          %1973 = vmatprep.subr.mxu0 0.0
          %1974 = vmatpush1.msra.mxu0 0.0
          %1975 = vmatprep.subr.mxu0 0.0
          %1976 = vmatpush1.msra.mxu0 0.0
          %1977 = vmatprep.subr.mxu0 0.0
          %1978 = vmatpush1.msra.mxu0 0.0
          %1979 = vmatprep.subr.mxu0 0.0
          %1980 = vmatpush1.msra.mxu0 0.0
          %1981 = vmatprep.subr.mxu0 0.0
          %1982 = vmatpush1.msra.mxu0 0.0
          %1983 = vmatprep.subr.mxu0 0.0
          %1984 = vmatpush1.msra.mxu0 0.0
          %1985 = vmatprep.subr.mxu0 0.0
          %1986 = vmatpush1.msra.mxu0 0.0
          %1987 = vmatprep.subr.mxu0 0.0
          %1988 = vmatpush1.msra.mxu0 0.0
          %1989 = vmatprep.subr.mxu0 0.0
          %1990 = vmatpush1.msra.mxu0 0.0
          %1991 = vmatprep.subr.mxu0 0.0
          %1992 = vmatpush1.msra.mxu0 0.0
          %1993 = vmatprep.subr.mxu0 0.0
          %1994 = vmatpush1.msra.mxu0 0.0
          %1995 = vmatprep.subr.mxu0 0.0
          %1996 = vmatpush1.msra.mxu0 0.0
          %1997 = vmatprep.subr.mxu0 0.0
          %1998 = vmatpush1.msra.mxu0 0.0
          %1999 = vmatprep.subr.mxu0 0.0
          %2000 = vmatpush1.msra.mxu0 0.0
          %2001 = vmatprep.subr.mxu0 0.0
          %2002 = vmatpush1.msra.mxu0 0.0
          %2003 = vmatprep.subr.mxu0 0.0
          %2004 = vmatpush1.msra.mxu0 0.0
          %2005 = vmatprep.mubr.f32.mxu0 0.0
          %v2006 = vand.u32 %v1564, 4294901760
          %2007 = vmatmul.mubr.f32.gmra.mrb[0].mxu0 %v2006
          %v2008 = vpop.f32.mrb[0].mxu0
          %v2009 = vadd.f32 %v1937, %v2008
          %v2010 = vpop.f32.mrb[0].mxu0
          %2011 = vdwg.mxu0
          %v2012 = vadd.f32 %v1562, %v2009
          %2013 = vst.msk [vmem:[%s369] sm:$0xff] %vm1339, %v2012
        $region56: #{tpu_custom_call.1} parent=39 // pred_fallthru
          _
        %s2014 = sand.u32 %s185, 1
        %s2015 = scalar_lea.sflag [#allocation5], %s2014
        %s2016 = sand.u32 %s185, 1
        %s2017 = smul.addr %s2016, 8
        %s2018 = scalar_lea.vmem [#allocation8], %s2017
        %s2019 = sand.u32 %s215, 1
        %s2020 = scalar_lea.sflag [#allocation10], %s2019
        %s2021 = sand.u32 %s215, 1
        %s2022 = smul.addr %s2021, 64
        %s2023 = scalar_lea.vmem [#allocation9], %s2022
        // Predicated region
        $region57: #{tpu_custom_call.1} parent=39 // pred_check
          %p2024 = pneg %p195
        $region58: #{tpu_custom_call.1} parent=39 // pred_check_branch
          %2026 = sbr.rel (%p2024) target = $region60
        $region59: #{tpu_custom_call.1} parent=39 // pred_region
          %s2028 = ssub.s32 128, 128
          %2029 = vsyncadd %s2015, %s2028
          %s2030 = smul.addr %s35, 128
          %s2031 = scalar_lea.hbm %s5, %s2030
          %s2033 = sshll.u32 %s2018, 4
          %s2034 = int_to_ptr.vmem [resolvable:$true] %s2033
          %2036 = dma.vmem_to_hbm [thread:$0]  %s2034, 128, %s2031, %s2015
        $region60: #{tpu_custom_call.1} parent=39 // pred_fallthru
          _
        // Predicated region
        $region61: #{tpu_custom_call.1} parent=39 // pred_check
          %p2037 = pneg %p225
        $region62: #{tpu_custom_call.1} parent=39 // pred_check_branch
          %2039 = sbr.rel (%p2037) target = $region64
        $region63: #{tpu_custom_call.1} parent=39 // pred_region
          %s2040 = smul.u32 8, %s37
          %s2042 = ssub.s32 1024, 1024
          %2043 = vsyncadd %s2020, %s2042
          %s2044 = sadd.s32 %s36, %s2040
          %s2045 = smul.addr %s35, 8
          %s2046 = sadd.s32 %s2044, %s2045
          %s2047 = smul.addr %s2046, 128
          %s2048 = scalar_lea.hbm %s6, %s2047
          %s2049 = sshll.u32 %s2023, 4
          %s2050 = int_to_ptr.vmem [resolvable:$true] %s2049
          %2055 = dma.vmem_to_hbm [thread:$0]  %s2050, 1024, %s2048, %s2020, 128, 128, 8
        $region64: #{tpu_custom_call.1} parent=39 // pred_fallthru
          _
      $region40: #{tpu_custom_call.1} parent=5 // pred_fallthru
        _
      %p2056 = scmp.le.s32.totalorder 2, %s25
      // Predicated region
      $region65: #{tpu_custom_call.1} parent=5 // pred_check
        %p2057 = pneg %p2056
      $region66: #{tpu_custom_call.1} parent=5 // pred_check_branch
        %2059 = sbr.rel (%p2057) target = $region68
      $region67: #{tpu_custom_call.1} parent=5 // pred_region
        %s2060 = ssub.s32 %s25, 2
        // Predicated region
        $region69: #{tpu_custom_call.1} parent=67 // pred_check
          %p2061 = pneg %p201
        $region70: #{tpu_custom_call.1} parent=67 // pred_check_branch
          %2063 = sbr.rel (%p2061) target = $region72
        $region71: #{tpu_custom_call.1} parent=67 // pred_region
          %s2064 = sand.u32 %s186, 1
          %s2065 = scalar_lea.sflag [#allocation5], %s2064
          %s2066 = sand.u32 %s186, 1
          %s2067 = smul.addr %s2066, 8
          %s2068 = scalar_lea.vmem [#allocation8], %s2067
          %2069 = dma.done %s2065, 128
        $region72: #{tpu_custom_call.1} parent=67 // pred_fallthru
          _
        // Predicated region
        $region73: #{tpu_custom_call.1} parent=67 // pred_check
          %p2070 = pneg %p231
        $region74: #{tpu_custom_call.1} parent=67 // pred_check_branch
          %2072 = sbr.rel (%p2070) target = $region76
        $region75: #{tpu_custom_call.1} parent=67 // pred_region
          %s2073 = sand.u32 %s216, 1
          %s2074 = scalar_lea.sflag [#allocation10], %s2073
          %s2075 = sand.u32 %s216, 1
          %s2076 = smul.addr %s2075, 64
          %s2077 = scalar_lea.vmem [#allocation9], %s2076
          %2078 = dma.done %s2074, 1024
        $region76: #{tpu_custom_call.1} parent=67 // pred_fallthru
          _
      $region68: #{tpu_custom_call.1} parent=5 // pred_fallthru
        _
    $region6: #{tpu_custom_call.1} parent=1 // loop_footer
      %s29 = sadd.s32 1, %s25
    $region7: #{tpu_custom_call.1} parent=1 // loop_footer_branch
      %24 = sbr.rel target = $region3
    $region8: #{tpu_custom_call.1} parent=1 // loop_exit
      _
    %2079 = vsyncpa [#allocation4], 1
    %s2080 = scalar_lea.sflag [#allocation4], 1
    %2081 = vsyncpa %s2080, 1
    %2082 = vsyncpa [#allocation7], 1
    %s2083 = scalar_lea.sflag [#allocation7], 1
    %2084 = vsyncpa %s2083, 1
    %2085 = vsyncpa [#allocation5], 1
    %s2086 = scalar_lea.sflag [#allocation5], 1
    %2087 = vsyncpa %s2086, 1
    %2088 = vsyncpa [#allocation10], 1
    %s2089 = scalar_lea.sflag [#allocation10], 1
    %2090 = vsyncpa %s2089, 1

</llo_original>
